<compile_context>
chip_gen: v5e
topology: v5e:2x2
jax: 0.10.0
libtpu: 0.0.40
codegen_flags: <defaults>
</compile_context>

<pallas_src>
import jax
import jax.numpy as jnp
from jax.experimental import pallas as pl
from jax.experimental.pallas import tpu as pltpu

BN_EPS = 1e-5


def _transition_up_kernel(x_ref, w_ref, shift_ref, skip_ref, out_ref):
    # x_ref    : (1, H+2, W+2, Cin)    zero-padded LOW-RES input (whole image per batch elem)
    # w_ref    : (2, 6*Cin, 2*Cout)    folded conv+BN weights, one (K, N) matrix per row phase
    # shift_ref: (1, 2*Cout)           folded conv-bias + BN shift (tiled over column phase)
    # skip_ref : (1, 2, TH*W, 2*Cout)  row-phase-major skip tile
    # out_ref  : (1, 2, TH*W, 2*Cout)  row-phase-major output tile
    _, _, wpad, cin = x_ref.shape
    w_lr = wpad - 2                       # low-res width
    th = out_ref.shape[2] // w_lr         # low-res rows handled by this grid step

    shift = shift_ref[...]                # (1, 2*Cout)
    t = pl.program_id(1)
    row0 = pl.multiple_of(t * th, th)     # first padded low-res row of this tile

    for ri in range(2):                   # output row phase (even / odd output rows)
        # im2col over 2 row taps x 3 col taps of the padded low-res input.
        taps = []
        for dr in range(2):
            for dc in range(3):
                taps.append(x_ref[0, pl.ds(row0 + ri + dr, th), dc:dc + w_lr, :])
        patch = jnp.concatenate(taps, axis=-1).reshape(th * w_lr, 6 * cin)

        # One MXU matmul produces both column phases, already interleaved as
        # (.., rj*Cout + co) which is exactly the flattened (W2, Cout) row layout.
        y = jnp.dot(patch, w_ref[ri], preferred_element_type=jnp.float32)
        y = jnp.maximum(y + shift, 0.0)                        # folded bias/BN + ReLU
        y = y + skip_ref[0, ri].astype(jnp.float32)            # + skip
        out_ref[0, ri] = y.astype(out_ref.dtype)


def _pick_row_tile(h, w, cout, itemsize=4, budget_bytes=1 << 20):
    """TH = low-res rows per grid step: a multiple of 8 dividing h, keeping the
    per-step out/skip blocks under `budget_bytes` (VMEM-safe even on v7x's 64 MiB)
    and giving >= 2 row tiles when possible so both v7x TensorCores get work."""
    if h % 8 != 0:
        return h                                   # tiny input: one full-height tile
    cands = [th for th in range(8, h + 1, 8) if h % th == 0]
    block_bytes = lambda th: 4 * th * w * cout * itemsize   # (2, TH*W, 2*Cout) f32
    fit = [th for th in cands if block_bytes(th) <= budget_bytes and th < h]
    return max(fit) if fit else min(cands)


def transition_up_forward(upsample_nchw, skip_nchw, params):
    """upsample_nchw: (N, Cin, H, W); skip_nchw: (N, Cin//2, 2H, 2W) -> NCHW output."""
    w_oihw = params["conv_w"].astype(jnp.float32)     # (Cout, Cin, 3, 3)
    bias = params["conv_b"].astype(jnp.float32)
    gamma = params["bn_w"].astype(jnp.float32)
    beta = params["bn_b"].astype(jnp.float32)
    mean = params["bn_mean"].astype(jnp.float32)
    var = params["bn_var"].astype(jnp.float32)

    N, Cin, H, W = upsample_nchw.shape
    Cout = w_oihw.shape[0]
    H2, W2 = 2 * H, 2 * W
    assert skip_nchw.shape == (N, Cout, H2, W2)

    # --- fold conv bias + eval-mode BN into weight scale and an additive shift ---
    # TODO(synk): training-mode BN (batch statistics) not implemented.
    scale = gamma * jax.lax.rsqrt(var + BN_EPS)                     # (Cout,)
    shift = beta + (bias - mean) * scale                            # (Cout,)
    w_hwio = jnp.transpose(w_oihw, (2, 3, 1, 0)) * scale            # (3,3,Cin,Cout) scaled

    # --- sub-pixel (phase) decomposition of nearest-2x upsample + 3x3 conv ---
    # out[2a+ri, 2b+rj] = sum_{dr,dc' in {0,1}} Wp[ri,rj,dr,dc'] * xpad[a+ri+dr, b+rj+dc']
    comb = jnp.array([[[1., 0., 0.], [0., 1., 1.]],
                      [[1., 1., 0.], [0., 0., 1.]]], jnp.float32)   # [phase, tap, k3]
    wp = jnp.einsum("adk,bel,klio->abdeio", comb, comb, w_hwio)     # (2,2,2,2,Cin,Cout)

    # Widen to 3 column taps (dc in {0,1,2}) so both column phases share one matmul:
    # K-order (dr, dc, ci), N-order (rj, co)  ->  (2, 6*Cin, 2*Cout) per row phase.
    w_big = jnp.zeros((2, 2, 3, Cin, 2, Cout), jnp.float32)
    w_big = w_big.at[:, :, 0:2, :, 0, :].set(wp[:, 0])    # rj=0 uses padded cols b+0, b+1
    w_big = w_big.at[:, :, 1:3, :, 1, :].set(wp[:, 1])    # rj=1 uses padded cols b+1, b+2
    w_big = w_big.reshape(2, 6 * Cin, 2 * Cout)
    shift2 = jnp.tile(shift, 2).reshape(1, 2 * Cout)      # [rj=0 | rj=1]

    # --- layout glue (single transpose pass each; the heavy upsampled tensor is
    #     never formed, only the small low-res input is padded) ---
    x = jnp.transpose(upsample_nchw, (0, 2, 3, 1)).astype(jnp.float32)  # low-res NHWC
    x = jnp.pad(x, ((0, 0), (1, 1), (1, 1), (0, 0)))                    # (N, H+2, W+2, Cin)

    # skip: NCHW -> row-phase-major flattened rows:
    #   skip_ph[n, ri, a*W + b, rj*Cout + co] = skip[n, co, 2a+ri, 2b+rj]
    skip_ph = skip_nchw.astype(jnp.float32).reshape(N, Cout, H, 2, W, 2)
    skip_ph = jnp.transpose(skip_ph, (0, 3, 2, 4, 5, 1))                # (N,2,H,W,2,Cout)
    skip_ph = skip_ph.reshape(N, 2, H * W, 2 * Cout)

    TH = _pick_row_tile(H, W, Cout)
    n_row_tiles = H // TH

    out_ph = pl.pallas_call(
        _transition_up_kernel,
        out_shape=jax.ShapeDtypeStruct((N, 2, H * W, 2 * Cout), upsample_nchw.dtype),
        grid_spec=pltpu.PrefetchScalarGridSpec(
            num_scalar_prefetch=0,
            grid=(N, n_row_tiles),
            in_specs=[
                # whole padded low-res image stays resident across row tiles of a batch elem
                # TODO(synk): halo row-tiling of the low-res input itself not implemented.
                pl.BlockSpec((1, H + 2, W + 2, Cin), lambda n, t: (n, 0, 0, 0)),
                pl.BlockSpec((2, 6 * Cin, 2 * Cout), lambda n, t: (0, 0, 0)),
                pl.BlockSpec((1, 2 * Cout), lambda n, t: (0, 0)),
                pl.BlockSpec((1, 2, TH * W, 2 * Cout), lambda n, t: (n, 0, t, 0)),
            ],
            out_specs=pl.BlockSpec((1, 2, TH * W, 2 * Cout), lambda n, t: (n, 0, t, 0)),
        ),
        compiler_params=pltpu.CompilerParams(
            dimension_semantics=("parallel", "parallel"),
            vmem_limit_bytes=48 * 1024 * 1024),
    )(x, w_big, shift2, skip_ph)

    # kernel output -> NCHW in a single transpose pass (replaces NHWC->NCHW transpose)
    out = out_ph.reshape(N, 2, H, W, 2, Cout)
    out = jnp.transpose(out, (0, 5, 2, 1, 3, 4))          # (N, Cout, H, 2, W, 2)
    return out.reshape(N, Cout, H2, W2)


def _reference(upsample, skip, params):
    """Pure-JAX reference of the PyTorch forward (eval-mode BN)."""
    x = jnp.repeat(jnp.repeat(upsample, 2, axis=2), 2, axis=3)
    conv = jax.lax.conv_general_dilated(
        x, params["conv_w"], window_strides=(1, 1), padding=((1, 1), (1, 1)),
        dimension_numbers=("NCHW", "OIHW", "NCHW"),
        precision=jax.lax.Precision.HIGHEST)
    conv = conv + params["conv_b"][None, :, None, None]
    scale = params["bn_w"] / jnp.sqrt(params["bn_var"] + BN_EPS)
    shift = params["bn_b"] - params["bn_mean"] * scale
    bn = conv * scale[None, :, None, None] + shift[None, :, None, None]
    return jnp.maximum(bn, 0.0) + skip


if __name__ == "__main__":
    key = jax.random.PRNGKey(0)
    k_up, k_skip, k_w, k_b, k_g, k_bb, k_m, k_v = jax.random.split(key, 8)

    # TransitionUp(upsample_channels=4): up_channels = out_channels = 2
    N, Cin, H, W = 2, 4, 16, 16
    Cout = Cin // 2
    upsample = jax.random.normal(k_up, (N, Cin, H, W), dtype=jnp.float32)
    skip = jax.random.normal(k_skip, (N, Cout, 2 * H, 2 * W), dtype=jnp.float32)

    params = {
        # Conv2d(4, 2, kernel_size=3, padding=1, bias=True)
        "conv_w": 0.1 * jax.random.normal(k_w, (Cout, Cin, 3, 3), dtype=jnp.float32),
        "conv_b": 0.05 * jax.random.normal(k_b, (Cout,), dtype=jnp.float32),
        # BatchNorm2d(2), eval mode with non-trivial running stats.
        "bn_w": 0.9 + 0.2 * jax.random.uniform(k_g, (Cout,), dtype=jnp.float32),
        "bn_b": 0.1 * jax.random.normal(k_bb, (Cout,), dtype=jnp.float32),
        "bn_mean": 0.1 * jax.random.normal(k_m, (Cout,), dtype=jnp.float32),
        "bn_var": 0.5 + jax.random.uniform(k_v, (Cout,), dtype=jnp.float32),
    }

    out = transition_up_forward(upsample, skip, params)
    out = jax.block_until_ready(out)

    ref = _reference(upsample, skip, params)
    assert out.shape == (N, Cout, 2 * H, 2 * W)
    assert jnp.allclose(out, ref, atol=1e-4, rtol=1e-4), "mismatch vs reference"

    print("KERNEL_OK")
</pallas_src>

<mosaic_0001>
module attributes {stable_mosaic.version = 11 : i64} {
  func.func @_transition_up_kernel(%arg0: i32, %arg1: i32, %arg2: memref<1x18x18x4xf32, #tpu.memory_space<vmem>>, %arg3: memref<2x24x4xf32, #tpu.memory_space<vmem>>, %arg4: memref<1x4xf32, #tpu.memory_space<vmem>>, %arg5: memref<1x2x128x4xf32, #tpu.memory_space<vmem>>, %arg6: memref<1x2x128x4xf32, #tpu.memory_space<vmem>>) attributes {dimension_semantics = [#tpu.dimension_semantics<parallel>, #tpu.dimension_semantics<parallel>], iteration_bounds = array<i64: 2, 2>, scalar_prefetch = 0 : i64, scratch_operands = 0 : i64, tpu.core_type = #tpu.core_type<tc>, window_params = [{transform_indices = @transform_0, window_bounds = array<i64: 1, 18, 18, 4>}, {pipeline_mode = #tpu.pipeline_mode<synchronous>, transform_indices = @transform_1, window_bounds = array<i64: 2, 24, 4>}, {pipeline_mode = #tpu.pipeline_mode<synchronous>, transform_indices = @transform_2, window_bounds = array<i64: 1, 4>}, {transform_indices = @transform_3, window_bounds = array<i64: 1, 2, 128, 4>}, {transform_indices = @transform_4, window_bounds = array<i64: 1, 2, 128, 4>}]} {
    %c0 = arith.constant 0 : index
    %c0_0 = arith.constant 0 : index
    %0 = vector.load %arg4[%c0, %c0_0] : memref<1x4xf32, #tpu.memory_space<vmem>>, vector<1x4xf32>
    %c8_i32 = arith.constant 8 : i32
    %1 = arith.muli %arg1, %c8_i32 : i32
    %2 = tpu.assume_multiple %1, 8 : i32
    %c0_i32 = arith.constant 0 : i32
    %3 = arith.addi %2, %c0_i32 : i32
    %c0_i32_1 = arith.constant 0 : i32
    %4 = arith.addi %3, %c0_i32_1 : i32
    %c0_2 = arith.constant 0 : index
    %5 = arith.index_cast %4 : i32 to index
    %c0_3 = arith.constant 0 : index
    %c0_4 = arith.constant 0 : index
    %6 = vector.load %arg2[%c0_2, %5, %c0_3, %c0_4] : memref<1x18x18x4xf32, #tpu.memory_space<vmem>>, vector<1x8x16x4xf32>
    %7 = vector.shape_cast %6 : vector<1x8x16x4xf32> to vector<8x16x4xf32>
    %c0_i32_5 = arith.constant 0 : i32
    %8 = arith.addi %2, %c0_i32_5 : i32
    %c0_i32_6 = arith.constant 0 : i32
    %9 = arith.addi %8, %c0_i32_6 : i32
    %c0_7 = arith.constant 0 : index
    %10 = arith.index_cast %9 : i32 to index
    %c1 = arith.constant 1 : index
    %c0_8 = arith.constant 0 : index
    %11 = vector.load %arg2[%c0_7, %10, %c1, %c0_8] : memref<1x18x18x4xf32, #tpu.memory_space<vmem>>, vector<1x8x16x4xf32>
    %12 = vector.shape_cast %11 : vector<1x8x16x4xf32> to vector<8x16x4xf32>
    %c0_i32_9 = arith.constant 0 : i32
    %13 = arith.addi %2, %c0_i32_9 : i32
    %c0_i32_10 = arith.constant 0 : i32
    %14 = arith.addi %13, %c0_i32_10 : i32
    %c0_11 = arith.constant 0 : index
    %15 = arith.index_cast %14 : i32 to index
    %c2 = arith.constant 2 : index
    %c0_12 = arith.constant 0 : index
    %16 = vector.load %arg2[%c0_11, %15, %c2, %c0_12] : memref<1x18x18x4xf32, #tpu.memory_space<vmem>>, vector<1x8x16x4xf32>
    %17 = vector.shape_cast %16 : vector<1x8x16x4xf32> to vector<8x16x4xf32>
    %c0_i32_13 = arith.constant 0 : i32
    %18 = arith.addi %2, %c0_i32_13 : i32
    %c1_i32 = arith.constant 1 : i32
    %19 = arith.addi %18, %c1_i32 : i32
    %c0_14 = arith.constant 0 : index
    %20 = arith.index_cast %19 : i32 to index
    %c0_15 = arith.constant 0 : index
    %c0_16 = arith.constant 0 : index
    %21 = vector.load %arg2[%c0_14, %20, %c0_15, %c0_16] : memref<1x18x18x4xf32, #tpu.memory_space<vmem>>, vector<1x8x16x4xf32>
    %22 = vector.shape_cast %21 : vector<1x8x16x4xf32> to vector<8x16x4xf32>
    %c0_i32_17 = arith.constant 0 : i32
    %23 = arith.addi %2, %c0_i32_17 : i32
    %c1_i32_18 = arith.constant 1 : i32
    %24 = arith.addi %23, %c1_i32_18 : i32
    %c0_19 = arith.constant 0 : index
    %25 = arith.index_cast %24 : i32 to index
    %c1_20 = arith.constant 1 : index
    %c0_21 = arith.constant 0 : index
    %26 = vector.load %arg2[%c0_19, %25, %c1_20, %c0_21] : memref<1x18x18x4xf32, #tpu.memory_space<vmem>>, vector<1x8x16x4xf32>
    %27 = vector.shape_cast %26 : vector<1x8x16x4xf32> to vector<8x16x4xf32>
    %c0_i32_22 = arith.constant 0 : i32
    %28 = arith.addi %2, %c0_i32_22 : i32
    %c1_i32_23 = arith.constant 1 : i32
    %29 = arith.addi %28, %c1_i32_23 : i32
    %c0_24 = arith.constant 0 : index
    %30 = arith.index_cast %29 : i32 to index
    %c2_25 = arith.constant 2 : index
    %c0_26 = arith.constant 0 : index
    %31 = vector.load %arg2[%c0_24, %30, %c2_25, %c0_26] : memref<1x18x18x4xf32, #tpu.memory_space<vmem>>, vector<1x8x16x4xf32>
    %32 = vector.shape_cast %31 : vector<1x8x16x4xf32> to vector<8x16x4xf32>
    %33 = tpu.concatenate %7, %12, %17, %22, %27, %32 in 2 : vector<8x16x4xf32>, vector<8x16x4xf32>, vector<8x16x4xf32>, vector<8x16x4xf32>, vector<8x16x4xf32>, vector<8x16x4xf32> -> vector<8x16x24xf32>
    %34 = vector.shape_cast %33 : vector<8x16x24xf32> to vector<128x24xf32>
    %c0_27 = arith.constant 0 : index
    %c0_28 = arith.constant 0 : index
    %c0_29 = arith.constant 0 : index
    %35 = vector.load %arg3[%c0_27, %c0_28, %c0_29] : memref<2x24x4xf32, #tpu.memory_space<vmem>>, vector<1x24x4xf32>
    %36 = vector.shape_cast %35 : vector<1x24x4xf32> to vector<24x4xf32>
    %cst = arith.constant dense<0.000000e+00> : vector<128x4xf32>
    %37 = tpu.matmul %34, %36, %cst {dimension_numbers = #tpu.dot_dimension_numbers<[1], [0], [0], [1], [0, 0, 1, 1], [], []>} : vector<128x24xf32>, vector<24x4xf32>, vector<128x4xf32> -> vector<128x4xf32>
    %38 = vector.broadcast %0 : vector<1x4xf32> to vector<128x4xf32>
    %39 = arith.addf %37, %38 : vector<128x4xf32>
    %cst_30 = arith.constant 0.000000e+00 : f32
    %40 = vector.broadcast %cst_30 : f32 to vector<128x4xf32>
    %41 = arith.maximumf %39, %40 : vector<128x4xf32>
    %c0_31 = arith.constant 0 : index
    %c0_32 = arith.constant 0 : index
    %c0_33 = arith.constant 0 : index
    %c0_34 = arith.constant 0 : index
    %42 = vector.load %arg5[%c0_31, %c0_32, %c0_33, %c0_34] : memref<1x2x128x4xf32, #tpu.memory_space<vmem>>, vector<1x1x128x4xf32>
    %43 = vector.shape_cast %42 : vector<1x1x128x4xf32> to vector<128x4xf32>
    %44 = arith.addf %41, %43 : vector<128x4xf32>
    %c0_35 = arith.constant 0 : index
    %c0_36 = arith.constant 0 : index
    %c0_37 = arith.constant 0 : index
    %c0_38 = arith.constant 0 : index
    %45 = vector.load %arg6[%c0_35, %c0_36, %c0_37, %c0_38] : memref<1x2x128x4xf32, #tpu.memory_space<vmem>>, vector<1x1x128x4xf32>
    %46 = vector.shape_cast %45 : vector<1x1x128x4xf32> to vector<128x4xf32>
    %47 = vector.shape_cast %44 : vector<128x4xf32> to vector<1x1x128x4xf32>
    tpu.vector_store %arg6[%c0_35, %c0_36, %c0_37, %c0_38], %47 {strides = array<i32>} : memref<1x2x128x4xf32, #tpu.memory_space<vmem>>, vector<1x1x128x4xf32>,
    %c1_i32_39 = arith.constant 1 : i32
    %48 = arith.addi %2, %c1_i32_39 : i32
    %c0_i32_40 = arith.constant 0 : i32
    %49 = arith.addi %48, %c0_i32_40 : i32
    %c0_41 = arith.constant 0 : index
    %50 = arith.index_cast %49 : i32 to index
    %c0_42 = arith.constant 0 : index
    %c0_43 = arith.constant 0 : index
    %51 = vector.load %arg2[%c0_41, %50, %c0_42, %c0_43] : memref<1x18x18x4xf32, #tpu.memory_space<vmem>>, vector<1x8x16x4xf32>
    %52 = vector.shape_cast %51 : vector<1x8x16x4xf32> to vector<8x16x4xf32>
    %c1_i32_44 = arith.constant 1 : i32
    %53 = arith.addi %2, %c1_i32_44 : i32
    %c0_i32_45 = arith.constant 0 : i32
    %54 = arith.addi %53, %c0_i32_45 : i32
    %c0_46 = arith.constant 0 : index
    %55 = arith.index_cast %54 : i32 to index
    %c1_47 = arith.constant 1 : index
    %c0_48 = arith.constant 0 : index
    %56 = vector.load %arg2[%c0_46, %55, %c1_47, %c0_48] : memref<1x18x18x4xf32, #tpu.memory_space<vmem>>, vector<1x8x16x4xf32>
    %57 = vector.shape_cast %56 : vector<1x8x16x4xf32> to vector<8x16x4xf32>
    %c1_i32_49 = arith.constant 1 : i32
    %58 = arith.addi %2, %c1_i32_49 : i32
    %c0_i32_50 = arith.constant 0 : i32
    %59 = arith.addi %58, %c0_i32_50 : i32
    %c0_51 = arith.constant 0 : index
    %60 = arith.index_cast %59 : i32 to index
    %c2_52 = arith.constant 2 : index
    %c0_53 = arith.constant 0 : index
    %61 = vector.load %arg2[%c0_51, %60, %c2_52, %c0_53] : memref<1x18x18x4xf32, #tpu.memory_space<vmem>>, vector<1x8x16x4xf32>
    %62 = vector.shape_cast %61 : vector<1x8x16x4xf32> to vector<8x16x4xf32>
    %c1_i32_54 = arith.constant 1 : i32
    %63 = arith.addi %2, %c1_i32_54 : i32
    %c1_i32_55 = arith.constant 1 : i32
    %64 = arith.addi %63, %c1_i32_55 : i32
    %c0_56 = arith.constant 0 : index
    %65 = arith.index_cast %64 : i32 to index
    %c0_57 = arith.constant 0 : index
    %c0_58 = arith.constant 0 : index
    %66 = vector.load %arg2[%c0_56, %65, %c0_57, %c0_58] : memref<1x18x18x4xf32, #tpu.memory_space<vmem>>, vector<1x8x16x4xf32>
    %67 = vector.shape_cast %66 : vector<1x8x16x4xf32> to vector<8x16x4xf32>
    %c1_i32_59 = arith.constant 1 : i32
    %68 = arith.addi %2, %c1_i32_59 : i32
    %c1_i32_60 = arith.constant 1 : i32
    %69 = arith.addi %68, %c1_i32_60 : i32
    %c0_61 = arith.constant 0 : index
    %70 = arith.index_cast %69 : i32 to index
    %c1_62 = arith.constant 1 : index
    %c0_63 = arith.constant 0 : index
    %71 = vector.load %arg2[%c0_61, %70, %c1_62, %c0_63] : memref<1x18x18x4xf32, #tpu.memory_space<vmem>>, vector<1x8x16x4xf32>
    %72 = vector.shape_cast %71 : vector<1x8x16x4xf32> to vector<8x16x4xf32>
    %c1_i32_64 = arith.constant 1 : i32
    %73 = arith.addi %2, %c1_i32_64 : i32
    %c1_i32_65 = arith.constant 1 : i32
    %74 = arith.addi %73, %c1_i32_65 : i32
    %c0_66 = arith.constant 0 : index
    %75 = arith.index_cast %74 : i32 to index
    %c2_67 = arith.constant 2 : index
    %c0_68 = arith.constant 0 : index
    %76 = vector.load %arg2[%c0_66, %75, %c2_67, %c0_68] : memref<1x18x18x4xf32, #tpu.memory_space<vmem>>, vector<1x8x16x4xf32>
    %77 = vector.shape_cast %76 : vector<1x8x16x4xf32> to vector<8x16x4xf32>
    %78 = tpu.concatenate %52, %57, %62, %67, %72, %77 in 2 : vector<8x16x4xf32>, vector<8x16x4xf32>, vector<8x16x4xf32>, vector<8x16x4xf32>, vector<8x16x4xf32>, vector<8x16x4xf32> -> vector<8x16x24xf32>
    %79 = vector.shape_cast %78 : vector<8x16x24xf32> to vector<128x24xf32>
    %c1_69 = arith.constant 1 : index
    %c0_70 = arith.constant 0 : index
    %c0_71 = arith.constant 0 : index
    %80 = vector.load %arg3[%c1_69, %c0_70, %c0_71] : memref<2x24x4xf32, #tpu.memory_space<vmem>>, vector<1x24x4xf32>
    %81 = vector.shape_cast %80 : vector<1x24x4xf32> to vector<24x4xf32>
    %cst_72 = arith.constant dense<0.000000e+00> : vector<128x4xf32>
    %82 = tpu.matmul %79, %81, %cst_72 {dimension_numbers = #tpu.dot_dimension_numbers<[1], [0], [0], [1], [0, 0, 1, 1], [], []>} : vector<128x24xf32>, vector<24x4xf32>, vector<128x4xf32> -> vector<128x4xf32>
    %83 = vector.broadcast %0 : vector<1x4xf32> to vector<128x4xf32>
    %84 = arith.addf %82, %83 : vector<128x4xf32>
    %cst_73 = arith.constant 0.000000e+00 : f32
    %85 = vector.broadcast %cst_73 : f32 to vector<128x4xf32>
    %86 = arith.maximumf %84, %85 : vector<128x4xf32>
    %c0_74 = arith.constant 0 : index
    %c1_75 = arith.constant 1 : index
    %c0_76 = arith.constant 0 : index
    %c0_77 = arith.constant 0 : index
    %87 = vector.load %arg5[%c0_74, %c1_75, %c0_76, %c0_77] : memref<1x2x128x4xf32, #tpu.memory_space<vmem>>, vector<1x1x128x4xf32>
    %88 = vector.shape_cast %87 : vector<1x1x128x4xf32> to vector<128x4xf32>
    %89 = arith.addf %86, %88 : vector<128x4xf32>
    %c0_78 = arith.constant 0 : index
    %c1_79 = arith.constant 1 : index
    %c0_80 = arith.constant 0 : index
    %c0_81 = arith.constant 0 : index
    %90 = vector.load %arg6[%c0_78, %c1_79, %c0_80, %c0_81] : memref<1x2x128x4xf32, #tpu.memory_space<vmem>>, vector<1x1x128x4xf32>
    %91 = vector.shape_cast %90 : vector<1x1x128x4xf32> to vector<128x4xf32>
    %92 = vector.shape_cast %89 : vector<128x4xf32> to vector<1x1x128x4xf32>
    tpu.vector_store %arg6[%c0_78, %c1_79, %c0_80, %c0_81], %92 {strides = array<i32>} : memref<1x2x128x4xf32, #tpu.memory_space<vmem>>, vector<1x1x128x4xf32>,
    return
  }
  func.func @transform_0(%arg0: i32, %arg1: i32) -> (i32, i32, i32, i32) {
    %c0_i32 = arith.constant 0 : i32
    %c0_i32_0 = arith.constant 0 : i32
    %c0_i32_1 = arith.constant 0 : i32
    %c0_i32_2 = arith.constant 0 : i32
    return %arg0, %c0_i32, %c0_i32_0, %c0_i32_1 : i32, i32, i32, i32
  }
  func.func @transform_1(%arg0: i32, %arg1: i32) -> (i32, i32, i32) {
    %c0_i32 = arith.constant 0 : i32
    %c0_i32_0 = arith.constant 0 : i32
    %c0_i32_1 = arith.constant 0 : i32
    %c0_i32_2 = arith.constant 0 : i32
    return %c0_i32, %c0_i32_0, %c0_i32_1 : i32, i32, i32
  }
  func.func @transform_2(%arg0: i32, %arg1: i32) -> (i32, i32) {
    %c0_i32 = arith.constant 0 : i32
    %c0_i32_0 = arith.constant 0 : i32
    %c0_i32_1 = arith.constant 0 : i32
    return %c0_i32, %c0_i32_0 : i32, i32
  }
  func.func @transform_3(%arg0: i32, %arg1: i32) -> (i32, i32, i32, i32) {
    %c0_i32 = arith.constant 0 : i32
    %c0_i32_0 = arith.constant 0 : i32
    %c0_i32_1 = arith.constant 0 : i32
    return %arg0, %c0_i32, %arg1, %c0_i32_0 : i32, i32, i32, i32
  }
  func.func @transform_4(%arg0: i32, %arg1: i32) -> (i32, i32, i32, i32) {
    %c0_i32 = arith.constant 0 : i32
    %c0_i32_0 = arith.constant 0 : i32
    %c0_i32_1 = arith.constant 0 : i32
    return %arg0, %c0_i32, %arg1, %c0_i32_0 : i32, i32, i32, i32
  }
}

</mosaic_0001>

<llo_original>
// kernel: tpu_custom_call.1
$region0: #{tpu_custom_call.1}
  #allocation0 [shape = 'u32[]', space=smem, size = 0x4, offset = 0x4, fixed_abs, tag = 'smem constant byte address 0x4 - core index']
  #allocation1 [shape = 'u32[72,128]{1,0:T(1,128)}', space=vmem, size = 0x9000, scoped, tag = 'internal scratch']
  %s0 = inlined_call_operand.vmem [shape: f32[2,18,18,4], index: 0, kind: input, shape index: {}]
  %s1 = inlined_call_operand.vmem [shape: f32[2,24,4], index: 1, kind: input, shape index: {}]
  %s2 = inlined_call_operand.vmem [shape: f32[1,4], index: 2, kind: input, shape index: {}]
  %s3 = inlined_call_operand.vmem [shape: f32[2,2,256,4], index: 3, kind: input, shape index: {}]
  %s4 = inlined_call_operand.vmem [shape: f32[2,2,256,4], index: 4, kind: output, shape index: {}]
  %s5 = sld [smem:[#allocation0]]
  $region121: #{tpu_custom_call.1} parent=0
    _
  %s7 = ssub.s32 1, %s5
  %s8 = scalar_select 0, %s7, %s5
  $region1: #{tpu_custom_call.1} parent=0
    #allocation2 [shape = 'u8[262144]{0}', space=vmem, size = 0x40000, scoped, tag = 'input window, operand 3']
    #allocation3 [shape = 'u8[262144]{0}', space=vmem, size = 0x40000, scoped, tag = 'output window, operand 0']
    loop: start=0, step=1, limit=6
    $region2: #{tpu_custom_call.1} parent=1 // loop_pre_header
      _
    $region3: #{tpu_custom_call.1} parent=1 // loop_header
      %s10 = sphi 0, %s14
      %p11 = scmp.ge.s32.totalorder %s10, 6
      %s17 = sphi 0, %s29
      %s18 = sphi 0, %s25
      %s19 = sphi 0, %s17
      %s20 = sphi 0, %s18
      %s21 = sphi 0, %s19
      %s22 = sphi 0, %s20
      %s32 = sphi 0, %s34
      %s35 = sphi 0, %s32
      %s36 = sphi 0, %s35
      %s52 = sphi 0, %s36
      %s56 = sphi 0, %s56
      %s58 = sphi 0, %s56
      %s59 = sphi 0, %s58
      %s73 = sphi 0, %s59
      %s77 = sphi 0, %s77
      %s79 = sphi 0, %s77
      %s80 = sphi 0, %s79
      %s94 = sphi 0, %s80
      %s102 = sphi 0, %s104
      %s105 = sphi 0, %s102
      %s106 = sphi 0, %s105
      %s122 = sphi 0, %s106
      %s130 = sphi 0, %s132
      %s133 = sphi 0, %s130
      %s134 = sphi 0, %s133
      %s150 = sphi 0, %s134
    $region4: #{tpu_custom_call.1} parent=1 // loop_header_branch
      %13 = sbr.rel (%p11) target = $region8
    $region5: #{tpu_custom_call.1} parent=1 // loop_body
      %s15 = ssub.s32 %s10, 1
      %s16 = ssub.s32 %s10, 2
      %s23 = sadd.s32 1, %s18
      %p24 = scmp.ge.s32.totalorder %s23, 2
      %s25 = scalar_select %p24, 0, %s23
      %s26 = sadd.s32 1, %s17
      %s27 = scalar_select %p24, %s26, %s17
      %p28 = scmp.ge.s32.totalorder %s27, 2
      %s29 = scalar_select %p28, 0, %s27
      %s30 = ssub.s32 %s17, %s29
      %p31 = scmp.eq.s32.totalorder %s30, 0
      %s33 = sadd.s32 %s32, 1
      %s34 = scalar_select %p31, %s32, %s33
      %p37 = pneg %p31
      %p38 = scmp.eq.s32.totalorder %s10, 3
      %p39 = por %p37, %p38
      %p40 = scmp.ne.s32.totalorder %s32, %s35
      %p41 = scmp.eq.s32.totalorder %s10, 0
      %p42 = por %p40, %p41
      %p43 = scmp.ne.s32.totalorder %s32, %s35
      %p44 = scmp.eq.s32.totalorder %s15, 3
      %p45 = por %p43, %p44
      %p46 = scmp.ne.s32.totalorder %s35, %s36
      %p47 = scmp.eq.s32.totalorder %s15, 0
      %p48 = por %p46, %p47
      %p49 = scmp.ne.s32.totalorder %s35, %s36
      %p50 = scmp.eq.s32.totalorder %s16, 3
      %p51 = por %p49, %p50
      %p53 = scmp.ne.s32.totalorder %s36, %s52
      %p54 = scmp.eq.s32.totalorder %s16, 0
      %p55 = por %p53, %p54
      %s57 = sadd.s32 %s56, 1
      %p60 = scmp.eq.s32.totalorder %s10, 3
      %p61 = scmp.ne.s32.totalorder %s56, %s58
      %p62 = scmp.eq.s32.totalorder %s10, 0
      %p63 = por %p61, %p62
      %p64 = scmp.ne.s32.totalorder %s56, %s58
      %p65 = scmp.eq.s32.totalorder %s15, 3
      %p66 = por %p64, %p65
      %p67 = scmp.ne.s32.totalorder %s58, %s59
      %p68 = scmp.eq.s32.totalorder %s15, 0
      %p69 = por %p67, %p68
      %p70 = scmp.ne.s32.totalorder %s58, %s59
      %p71 = scmp.eq.s32.totalorder %s16, 3
      %p72 = por %p70, %p71
      %p74 = scmp.ne.s32.totalorder %s59, %s73
      %p75 = scmp.eq.s32.totalorder %s16, 0
      %p76 = por %p74, %p75
      %s78 = sadd.s32 %s77, 1
      %p81 = scmp.eq.s32.totalorder %s10, 3
      %p82 = scmp.ne.s32.totalorder %s77, %s79
      %p83 = scmp.eq.s32.totalorder %s10, 0
      %p84 = por %p82, %p83
      %p85 = scmp.ne.s32.totalorder %s77, %s79
      %p86 = scmp.eq.s32.totalorder %s15, 3
      %p87 = por %p85, %p86
      %p88 = scmp.ne.s32.totalorder %s79, %s80
      %p89 = scmp.eq.s32.totalorder %s15, 0
      %p90 = por %p88, %p89
      %p91 = scmp.ne.s32.totalorder %s79, %s80
      %p92 = scmp.eq.s32.totalorder %s16, 3
      %p93 = por %p91, %p92
      %p95 = scmp.ne.s32.totalorder %s80, %s94
      %p96 = scmp.eq.s32.totalorder %s16, 0
      %p97 = por %p95, %p96
      %s98 = ssub.s32 %s17, %s29
      %s99 = ssub.s32 %s18, %s25
      %s100 = sor.u32 %s98, %s99
      %p101 = scmp.eq.s32.totalorder %s100, 0
      %s103 = sadd.s32 %s102, 1
      %s104 = scalar_select %p101, %s102, %s103
      %p107 = pneg %p101
      %p108 = scmp.eq.s32.totalorder %s10, 3
      %p109 = por %p107, %p108
      %p110 = scmp.ne.s32.totalorder %s102, %s105
      %p111 = scmp.eq.s32.totalorder %s10, 0
      %p112 = por %p110, %p111
      %p113 = scmp.ne.s32.totalorder %s102, %s105
      %p114 = scmp.eq.s32.totalorder %s15, 3
      %p115 = por %p113, %p114
      %p116 = scmp.ne.s32.totalorder %s105, %s106
      %p117 = scmp.eq.s32.totalorder %s15, 0
      %p118 = por %p116, %p117
      %p119 = scmp.ne.s32.totalorder %s105, %s106
      %p120 = scmp.eq.s32.totalorder %s16, 3
      %p121 = por %p119, %p120
      %p123 = scmp.ne.s32.totalorder %s106, %s122
      %p124 = scmp.eq.s32.totalorder %s16, 0
      %p125 = por %p123, %p124
      %s126 = ssub.s32 %s17, %s29
      %s127 = ssub.s32 %s18, %s25
      %s128 = sor.u32 %s126, %s127
      %p129 = scmp.eq.s32.totalorder %s128, 0
      %s131 = sadd.s32 %s130, 1
      %s132 = scalar_select %p129, %s130, %s131
      %p135 = pneg %p129
      %p136 = scmp.eq.s32.totalorder %s10, 3
      %p137 = por %p135, %p136
      %p138 = scmp.ne.s32.totalorder %s130, %s133
      %p139 = scmp.eq.s32.totalorder %s10, 0
      %p140 = por %p138, %p139
      %p141 = scmp.ne.s32.totalorder %s130, %s133
      %p142 = scmp.eq.s32.totalorder %s15, 3
      %p143 = por %p141, %p142
      %p144 = scmp.ne.s32.totalorder %s133, %s134
      %p145 = scmp.eq.s32.totalorder %s15, 0
      %p146 = por %p144, %p145
      %p147 = scmp.ne.s32.totalorder %s133, %s134
      %p148 = scmp.eq.s32.totalorder %s16, 3
      %p149 = por %p147, %p148
      %p151 = scmp.ne.s32.totalorder %s134, %s150
      %p152 = scmp.eq.s32.totalorder %s16, 0
      %p153 = por %p151, %p152
      %p154 = scmp.le.s32.totalorder 1, %s10
      %p155 = scmp.lt.s32.totalorder %s10, 5
      %p156 = pnand %p154, %p155
      %p157 = pneg %p156
      // Predicated region
      $region9: #{tpu_custom_call.1} parent=5 // pred_check
        _
      $region10: #{tpu_custom_call.1} parent=5 // pred_check_branch
        %159 = sbr.rel (%p156) target = $region12
      $region11: #{tpu_custom_call.1} parent=5 // pred_region
        %s160 = ssub.s32 %s10, 1
        // Predicated region
        $region13: #{tpu_custom_call.1} parent=11 // pred_check
          %p161 = pneg %p69
        $region14: #{tpu_custom_call.1} parent=11 // pred_check_branch
          %163 = sbr.rel (%p161) target = $region16
        $region15: #{tpu_custom_call.1} parent=11 // pred_region
          _
        $region16: #{tpu_custom_call.1} parent=11 // pred_fallthru
          _
        // Predicated region
        $region17: #{tpu_custom_call.1} parent=11 // pred_check
          %p164 = pneg %p90
        $region18: #{tpu_custom_call.1} parent=11 // pred_check_branch
          %166 = sbr.rel (%p164) target = $region20
        $region19: #{tpu_custom_call.1} parent=11 // pred_region
          _
        $region20: #{tpu_custom_call.1} parent=11 // pred_fallthru
          _
      $region12: #{tpu_custom_call.1} parent=5 // pred_fallthru
        _
      %p167 = scmp.lt.s32.totalorder %s10, 4
      // Predicated region
      $region21: #{tpu_custom_call.1} parent=5 // pred_check
        %p168 = pneg %p167
      $region22: #{tpu_custom_call.1} parent=5 // pred_check_branch
        %170 = sbr.rel (%p168) target = $region24
      $region23: #{tpu_custom_call.1} parent=5 // pred_region
        // Predicated region
        $region25: #{tpu_custom_call.1} parent=23 // pred_check
          %p171 = pneg %p42
        $region26: #{tpu_custom_call.1} parent=23 // pred_check_branch
          %173 = sbr.rel (%p171) target = $region28
        $region27: #{tpu_custom_call.1} parent=23 // pred_region
          %p174 = scmp.lt.s32.totalorder %s17, 1
          %s175 = scalar_select %p174, %s17, 1
          %s176 = smul.addr %s175, 54
          %s177 = smul.addr %s176, 8
          %s178 = scalar_lea.vmem %s0, %s177
        $region28: #{tpu_custom_call.1} parent=23 // pred_fallthru
          _
        // Predicated region
        $region29: #{tpu_custom_call.1} parent=23 // pred_check
          %p179 = pneg %p112
        $region30: #{tpu_custom_call.1} parent=23 // pred_check_branch
          %181 = sbr.rel (%p179) target = $region32
        $region31: #{tpu_custom_call.1} parent=23 // pred_region
          %s182 = sand.u32 %s102, 1
          %s183 = sand.u32 %s102, 1
          %s184 = smul.addr %s183, 256
          %s185 = scalar_lea.vmem [#allocation2], %s184
          %s186 = smul.u32 16, %s18
          %s187 = smul.addr %s17, 64
          %s188 = sadd.s32 %s186, %s187
          %s189 = smul.addr %s188, 8
          %s190 = scalar_lea.vmem %s3, %s189
          // Predicated region
          $region33: #{tpu_custom_call.1} parent=31 // pred_check
            _
          $region34: #{tpu_custom_call.1} parent=31 // pred_check_branch
            %192 = sbr.rel (0) target = $region36
          $region35: #{tpu_custom_call.1} parent=31 // pred_region
            // Predicated region
            $region37: #{tpu_custom_call.1} parent=35 // pred_check
              _
            $region38: #{tpu_custom_call.1} parent=35 // pred_check_branch
              %194 = sbr.rel (0) target = $region40
            $region39: #{tpu_custom_call.1} parent=35 // pred_region
              // Predicated region
              $region52: #{tpu_custom_call.1} parent=39 // pred_check
                _
              $region53: #{tpu_custom_call.1} parent=39 // pred_check_branch
                %272 = sbr.rel (0) target = $region55
              $region54: #{tpu_custom_call.1} parent=39 // pred_region
                loop: start=0, step=1, limit=1
                $region56: #{tpu_custom_call.1} parent=54 // loop_pre_header
                  _
                $region57: #{tpu_custom_call.1} parent=54 // loop_header
                  %s274 = sphi 0, %s278
                  %p275 = scmp.ge.s32.totalorder %s274, 1
                  %s279 = sphi %s190, %s190
                  %s280 = sphi %s185, %s185
                $region58: #{tpu_custom_call.1} parent=54 // loop_header_branch
                  %277 = sbr.rel (%p275) target = $region62
                $region59: #{tpu_custom_call.1} parent=54 // loop_body
                  %v281 = vld [vmem:[%s279] sm:$0xff]
                  %282 = vst [vmem:[%s280] sm:$0xff] %v281
                  %v283 = vld [vmem:[%s279 + $0x8] sm:$0xff]
                  %284 = vst [vmem:[%s280 + $0x8] sm:$0xff] %v283
                  %v285 = vld [vmem:[%s279 + $0x10] sm:$0xff]
                  %286 = vst [vmem:[%s280 + $0x10] sm:$0xff] %v285
                  %v287 = vld [vmem:[%s279 + $0x18] sm:$0xff]
                  %288 = vst [vmem:[%s280 + $0x18] sm:$0xff] %v287
                  %v289 = vld [vmem:[%s279 + $0x20] sm:$0xff]
                  %290 = vst [vmem:[%s280 + $0x20] sm:$0xff] %v289
                  %v291 = vld [vmem:[%s279 + $0x28] sm:$0xff]
                  %292 = vst [vmem:[%s280 + $0x28] sm:$0xff] %v291
                  %v293 = vld [vmem:[%s279 + $0x30] sm:$0xff]
                  %294 = vst [vmem:[%s280 + $0x30] sm:$0xff] %v293
                  %v295 = vld [vmem:[%s279 + $0x38] sm:$0xff]
                  %296 = vst [vmem:[%s280 + $0x38] sm:$0xff] %v295
                  %v297 = vld [vmem:[%s279 + $0x40] sm:$0xff]
                  %298 = vst [vmem:[%s280 + $0x40] sm:$0xff] %v297
                  %v299 = vld [vmem:[%s279 + $0x48] sm:$0xff]
                  %300 = vst [vmem:[%s280 + $0x48] sm:$0xff] %v299
                  %v301 = vld [vmem:[%s279 + $0x50] sm:$0xff]
                  %302 = vst [vmem:[%s280 + $0x50] sm:$0xff] %v301
                  %v303 = vld [vmem:[%s279 + $0x58] sm:$0xff]
                  %304 = vst [vmem:[%s280 + $0x58] sm:$0xff] %v303
                  %v305 = vld [vmem:[%s279 + $0x60] sm:$0xff]
                  %306 = vst [vmem:[%s280 + $0x60] sm:$0xff] %v305
                  %v307 = vld [vmem:[%s279 + $0x68] sm:$0xff]
                  %308 = vst [vmem:[%s280 + $0x68] sm:$0xff] %v307
                  %v309 = vld [vmem:[%s279 + $0x70] sm:$0xff]
                  %310 = vst [vmem:[%s280 + $0x70] sm:$0xff] %v309
                  %v311 = vld [vmem:[%s279 + $0x78] sm:$0xff]
                  %312 = vst [vmem:[%s280 + $0x78] sm:$0xff] %v311
                  %v313 = vld [vmem:[%s279 + $0x100] sm:$0xff]
                  %314 = vst [vmem:[%s280 + $0x80] sm:$0xff] %v313
                  %v315 = vld [vmem:[%s279 + $0x108] sm:$0xff]
                  %316 = vst [vmem:[%s280 + $0x88] sm:$0xff] %v315
                  %v317 = vld [vmem:[%s279 + $0x110] sm:$0xff]
                  %318 = vst [vmem:[%s280 + $0x90] sm:$0xff] %v317
                  %v319 = vld [vmem:[%s279 + $0x118] sm:$0xff]
                  %320 = vst [vmem:[%s280 + $0x98] sm:$0xff] %v319
                  %v321 = vld [vmem:[%s279 + $0x120] sm:$0xff]
                  %322 = vst [vmem:[%s280 + $0xa0] sm:$0xff] %v321
                  %v323 = vld [vmem:[%s279 + $0x128] sm:$0xff]
                  %324 = vst [vmem:[%s280 + $0xa8] sm:$0xff] %v323
                  %v325 = vld [vmem:[%s279 + $0x130] sm:$0xff]
                  %326 = vst [vmem:[%s280 + $0xb0] sm:$0xff] %v325
                  %v327 = vld [vmem:[%s279 + $0x138] sm:$0xff]
                  %328 = vst [vmem:[%s280 + $0xb8] sm:$0xff] %v327
                  %v329 = vld [vmem:[%s279 + $0x140] sm:$0xff]
                  %330 = vst [vmem:[%s280 + $0xc0] sm:$0xff] %v329
                  %v331 = vld [vmem:[%s279 + $0x148] sm:$0xff]
                  %332 = vst [vmem:[%s280 + $0xc8] sm:$0xff] %v331
                  %v333 = vld [vmem:[%s279 + $0x150] sm:$0xff]
                  %334 = vst [vmem:[%s280 + $0xd0] sm:$0xff] %v333
                  %v335 = vld [vmem:[%s279 + $0x158] sm:$0xff]
                  %336 = vst [vmem:[%s280 + $0xd8] sm:$0xff] %v335
                  %v337 = vld [vmem:[%s279 + $0x160] sm:$0xff]
                  %338 = vst [vmem:[%s280 + $0xe0] sm:$0xff] %v337
                  %v339 = vld [vmem:[%s279 + $0x168] sm:$0xff]
                  %340 = vst [vmem:[%s280 + $0xe8] sm:$0xff] %v339
                  %v341 = vld [vmem:[%s279 + $0x170] sm:$0xff]
                  %342 = vst [vmem:[%s280 + $0xf0] sm:$0xff] %v341
                  %v343 = vld [vmem:[%s279 + $0x178] sm:$0xff]
                  %344 = vst [vmem:[%s280 + $0xf8] sm:$0xff] %v343
                $region60: #{tpu_custom_call.1} parent=54 // loop_footer
                  %s278 = sadd.s32 1, %s274
                $region61: #{tpu_custom_call.1} parent=54 // loop_footer_branch
                  %273 = sbr.rel target = $region57
                $region62: #{tpu_custom_call.1} parent=54 // loop_exit
                  _
              $region55: #{tpu_custom_call.1} parent=39 // pred_fallthru
                _
              // Predicated region
              $region63: #{tpu_custom_call.1} parent=39 // pred_check
                _
              $region64: #{tpu_custom_call.1} parent=39 // pred_check_branch
                %346 = sbr.rel target = $region66
              $region65: #{tpu_custom_call.1} parent=39 // pred_region
                _
              $region66: #{tpu_custom_call.1} parent=39 // pred_fallthru
                _
            $region40: #{tpu_custom_call.1} parent=35 // pred_fallthru
              _
            // Predicated region
            $region41: #{tpu_custom_call.1} parent=35 // pred_check
              _
            $region42: #{tpu_custom_call.1} parent=35 // pred_check_branch
              %196 = sbr.rel target = $region44
            $region43: #{tpu_custom_call.1} parent=35 // pred_region
              %s198 = ssub.s32 256, 1
              loop: start=0, step=1, limit=1
              $region45: #{tpu_custom_call.1} parent=43 // loop_pre_header
                _
              $region46: #{tpu_custom_call.1} parent=43 // loop_header
                %s200 = sphi 0, %s204
                %p201 = scmp.ge.s32.totalorder %s200, 1
                %s205 = sphi %s190, %s190
                %s206 = sphi %s185, %s185
              $region47: #{tpu_custom_call.1} parent=43 // loop_header_branch
                %203 = sbr.rel (%p201) target = $region51
              $region48: #{tpu_custom_call.1} parent=43 // loop_body
                %v207 = vld [vmem:[%s205] sm:%s198]
                %208 = vst [vmem:[%s206] sm:%s198] %v207
                %v209 = vld [vmem:[%s205 + $0x8] sm:%s198]
                %210 = vst [vmem:[%s206 + $0x8] sm:%s198] %v209
                %v211 = vld [vmem:[%s205 + $0x10] sm:%s198]
                %212 = vst [vmem:[%s206 + $0x10] sm:%s198] %v211
                %v213 = vld [vmem:[%s205 + $0x18] sm:%s198]
                %214 = vst [vmem:[%s206 + $0x18] sm:%s198] %v213
                %v215 = vld [vmem:[%s205 + $0x20] sm:%s198]
                %216 = vst [vmem:[%s206 + $0x20] sm:%s198] %v215
                %v217 = vld [vmem:[%s205 + $0x28] sm:%s198]
                %218 = vst [vmem:[%s206 + $0x28] sm:%s198] %v217
                %v219 = vld [vmem:[%s205 + $0x30] sm:%s198]
                %220 = vst [vmem:[%s206 + $0x30] sm:%s198] %v219
                %v221 = vld [vmem:[%s205 + $0x38] sm:%s198]
                %222 = vst [vmem:[%s206 + $0x38] sm:%s198] %v221
                %v223 = vld [vmem:[%s205 + $0x40] sm:%s198]
                %224 = vst [vmem:[%s206 + $0x40] sm:%s198] %v223
                %v225 = vld [vmem:[%s205 + $0x48] sm:%s198]
                %226 = vst [vmem:[%s206 + $0x48] sm:%s198] %v225
                %v227 = vld [vmem:[%s205 + $0x50] sm:%s198]
                %228 = vst [vmem:[%s206 + $0x50] sm:%s198] %v227
                %v229 = vld [vmem:[%s205 + $0x58] sm:%s198]
                %230 = vst [vmem:[%s206 + $0x58] sm:%s198] %v229
                %v231 = vld [vmem:[%s205 + $0x60] sm:%s198]
                %232 = vst [vmem:[%s206 + $0x60] sm:%s198] %v231
                %v233 = vld [vmem:[%s205 + $0x68] sm:%s198]
                %234 = vst [vmem:[%s206 + $0x68] sm:%s198] %v233
                %v235 = vld [vmem:[%s205 + $0x70] sm:%s198]
                %236 = vst [vmem:[%s206 + $0x70] sm:%s198] %v235
                %v237 = vld [vmem:[%s205 + $0x78] sm:%s198]
                %238 = vst [vmem:[%s206 + $0x78] sm:%s198] %v237
                %v239 = vld [vmem:[%s205 + $0x100] sm:%s198]
                %240 = vst [vmem:[%s206 + $0x80] sm:%s198] %v239
                %v241 = vld [vmem:[%s205 + $0x108] sm:%s198]
                %242 = vst [vmem:[%s206 + $0x88] sm:%s198] %v241
                %v243 = vld [vmem:[%s205 + $0x110] sm:%s198]
                %244 = vst [vmem:[%s206 + $0x90] sm:%s198] %v243
                %v245 = vld [vmem:[%s205 + $0x118] sm:%s198]
                %246 = vst [vmem:[%s206 + $0x98] sm:%s198] %v245
                %v247 = vld [vmem:[%s205 + $0x120] sm:%s198]
                %248 = vst [vmem:[%s206 + $0xa0] sm:%s198] %v247
                %v249 = vld [vmem:[%s205 + $0x128] sm:%s198]
                %250 = vst [vmem:[%s206 + $0xa8] sm:%s198] %v249
                %v251 = vld [vmem:[%s205 + $0x130] sm:%s198]
                %252 = vst [vmem:[%s206 + $0xb0] sm:%s198] %v251
                %v253 = vld [vmem:[%s205 + $0x138] sm:%s198]
                %254 = vst [vmem:[%s206 + $0xb8] sm:%s198] %v253
                %v255 = vld [vmem:[%s205 + $0x140] sm:%s198]
                %256 = vst [vmem:[%s206 + $0xc0] sm:%s198] %v255
                %v257 = vld [vmem:[%s205 + $0x148] sm:%s198]
                %258 = vst [vmem:[%s206 + $0xc8] sm:%s198] %v257
                %v259 = vld [vmem:[%s205 + $0x150] sm:%s198]
                %260 = vst [vmem:[%s206 + $0xd0] sm:%s198] %v259
                %v261 = vld [vmem:[%s205 + $0x158] sm:%s198]
                %262 = vst [vmem:[%s206 + $0xd8] sm:%s198] %v261
                %v263 = vld [vmem:[%s205 + $0x160] sm:%s198]
                %264 = vst [vmem:[%s206 + $0xe0] sm:%s198] %v263
                %v265 = vld [vmem:[%s205 + $0x168] sm:%s198]
                %266 = vst [vmem:[%s206 + $0xe8] sm:%s198] %v265
                %v267 = vld [vmem:[%s205 + $0x170] sm:%s198]
                %268 = vst [vmem:[%s206 + $0xf0] sm:%s198] %v267
                %v269 = vld [vmem:[%s205 + $0x178] sm:%s198]
                %270 = vst [vmem:[%s206 + $0xf8] sm:%s198] %v269
              $region49: #{tpu_custom_call.1} parent=43 // loop_footer
                %s204 = sadd.s32 1, %s200
              $region50: #{tpu_custom_call.1} parent=43 // loop_footer_branch
                %199 = sbr.rel target = $region46
              $region51: #{tpu_custom_call.1} parent=43 // loop_exit
                _
            $region44: #{tpu_custom_call.1} parent=35 // pred_fallthru
              _
          $region36: #{tpu_custom_call.1} parent=31 // pred_fallthru
            _
          %347 = vnop
        $region32: #{tpu_custom_call.1} parent=23 // pred_fallthru
          _
      $region24: #{tpu_custom_call.1} parent=5 // pred_fallthru
        _
      %p348 = scmp.le.s32.totalorder 1, %s10
      %p349 = scmp.lt.s32.totalorder %s10, 5
      %p350 = pnand %p348, %p349
      %p351 = pneg %p350
      // Predicated region
      $region67: #{tpu_custom_call.1} parent=5 // pred_check
        _
      $region68: #{tpu_custom_call.1} parent=5 // pred_check_branch
        %353 = sbr.rel (%p350) target = $region70
      $region69: #{tpu_custom_call.1} parent=5 // pred_region
        %s354 = ssub.s32 %s10, 1
        %s355 = sand.u32 %s105, 1
        %s356 = sand.u32 %s105, 1
        %s357 = smul.addr %s356, 256
        %s358 = scalar_lea.vmem [#allocation2], %s357
        // Predicated region
        $region71: #{tpu_custom_call.1} parent=69 // pred_check
          %p359 = pneg %p118
        $region72: #{tpu_custom_call.1} parent=69 // pred_check_branch
          %361 = sbr.rel (%p359) target = $region74
        $region73: #{tpu_custom_call.1} parent=69 // pred_region
          _
        $region74: #{tpu_custom_call.1} parent=69 // pred_fallthru
          _
        %p362 = scmp.lt.s32.totalorder %s19, 1
        %s363 = scalar_select %p362, %s19, 1
        %s364 = smul.addr %s363, 54
        %s365 = smul.addr %s364, 8
        %s366 = scalar_lea.vmem %s0, %s365
        %p367 = pneg %p48
        %p368 = pneg %p45
        %p369 = pneg %p69
        %p370 = pneg %p66
        %p371 = pneg %p90
        %p372 = pneg %p87
        %s373 = sand.u32 %s105, 1
        %s374 = sand.u32 %s105, 1
        %s375 = smul.addr %s374, 256
        %s376 = scalar_lea.vmem [#allocation2], %s375
        %p377 = pneg %p118
        %p378 = pneg %p115
        %p379 = pneg %p146
        %p380 = pneg %p143
        %s381 = sand.u32 %s133, 1
        %s382 = sand.u32 %s133, 1
        %s383 = smul.addr %s382, 256
        %s384 = scalar_lea.vmem [#allocation3], %s383
        %p385 = scmp.lt.s32.totalorder %s19, 1
        %s386 = scalar_select %p385, %s19, 1
        %s387 = smul.addr %s386, 54
        %s388 = smul.addr %s387, 8
        %s389 = scalar_lea.vmem %s0, %s388
        %s390 = smul.u32 16, %s20
        %s391 = smul.u32 16, %s20
        %v392 = vld [vmem:[%s2] sm:$0x1]
        %s393 = smul.u32 %s20, 8
        %s394 = smul.u32 %s393, 24
        %s395 = scalar_lea.vmem %s389, %s394
        %v396 = vld [vmem:[%s395] sm:$0xff]
        %v397 = vld [vmem:[%s395 + $0x8] sm:$0xff]
        %v398 = vld [vmem:[%s395 + $0x18] sm:$0xff]
        %v399 = vld [vmem:[%s395 + $0x20] sm:$0xff]
        %v400 = vld [vmem:[%s395 + $0x30] sm:$0xff]
        %v401 = vld [vmem:[%s395 + $0x38] sm:$0xff]
        %v402 = vld [vmem:[%s395 + $0x48] sm:$0xff]
        %v403 = vld [vmem:[%s395 + $0x50] sm:$0xff]
        %v404 = vld [vmem:[%s395 + $0x60] sm:$0xff]
        %v405 = vld [vmem:[%s395 + $0x68] sm:$0xff]
        %v406 = vld [vmem:[%s395 + $0x78] sm:$0xff]
        %v407 = vld [vmem:[%s395 + $0x80] sm:$0xff]
        %v408 = vld [vmem:[%s395 + $0x90] sm:$0xff]
        %v409 = vld [vmem:[%s395 + $0x98] sm:$0xff]
        %v410 = vld [vmem:[%s395 + $0xa8] sm:$0xff]
        %v411 = vld [vmem:[%s395 + $0xb0] sm:$0xff]
        %v412 = vld [vmem:[%s395 + $0x1] sm:$0xff]
        %v413 = vld [vmem:[%s395 + $0x9] sm:$0xff]
        %v414 = vld [vmem:[%s395 + $0x19] sm:$0xff]
        %v415 = vld [vmem:[%s395 + $0x21] sm:$0xff]
        %v416 = vld [vmem:[%s395 + $0x31] sm:$0xff]
        %v417 = vld [vmem:[%s395 + $0x39] sm:$0xff]
        %v418 = vld [vmem:[%s395 + $0x49] sm:$0xff]
        %v419 = vld [vmem:[%s395 + $0x51] sm:$0xff]
        %v420 = vld [vmem:[%s395 + $0x61] sm:$0xff]
        %v421 = vld [vmem:[%s395 + $0x69] sm:$0xff]
        %v422 = vld [vmem:[%s395 + $0x79] sm:$0xff]
        %v423 = vld [vmem:[%s395 + $0x81] sm:$0xff]
        %v424 = vld [vmem:[%s395 + $0x91] sm:$0xff]
        %v425 = vld [vmem:[%s395 + $0x99] sm:$0xff]
        %v426 = vld [vmem:[%s395 + $0xa9] sm:$0xff]
        %v427 = vld [vmem:[%s395 + $0xb1] sm:$0xff]
        %v428 = vld [vmem:[%s395 + $0x2] sm:$0xff]
        %v429 = vld [vmem:[%s395 + $0xa] sm:$0xff]
        %v430 = vld [vmem:[%s395 + $0x1a] sm:$0xff]
        %v431 = vld [vmem:[%s395 + $0x22] sm:$0xff]
        %v432 = vld [vmem:[%s395 + $0x32] sm:$0xff]
        %v433 = vld [vmem:[%s395 + $0x3a] sm:$0xff]
        %v434 = vld [vmem:[%s395 + $0x4a] sm:$0xff]
        %v435 = vld [vmem:[%s395 + $0x52] sm:$0xff]
        %v436 = vld [vmem:[%s395 + $0x62] sm:$0xff]
        %v437 = vld [vmem:[%s395 + $0x6a] sm:$0xff]
        %v438 = vld [vmem:[%s395 + $0x7a] sm:$0xff]
        %v439 = vld [vmem:[%s395 + $0x82] sm:$0xff]
        %v440 = vld [vmem:[%s395 + $0x92] sm:$0xff]
        %v441 = vld [vmem:[%s395 + $0x9a] sm:$0xff]
        %v442 = vld [vmem:[%s395 + $0xaa] sm:$0xff]
        %v443 = vld [vmem:[%s395 + $0xb2] sm:$0xff]
        %s444 = sadd.s32 %s393, 1
        %s445 = smul.u32 %s444, 24
        %s446 = scalar_lea.vmem %s389, %s445
        %v447 = vld [vmem:[%s446] sm:$0xff]
        %v448 = vld [vmem:[%s446 + $0x8] sm:$0xff]
        %v449 = vld [vmem:[%s446 + $0x18] sm:$0xff]
        %v450 = vld [vmem:[%s446 + $0x20] sm:$0xff]
        %v451 = vld [vmem:[%s446 + $0x30] sm:$0xff]
        %v452 = vld [vmem:[%s446 + $0x38] sm:$0xff]
        %v453 = vld [vmem:[%s446 + $0x48] sm:$0xff]
        %v454 = vld [vmem:[%s446 + $0x50] sm:$0xff]
        %v455 = vld [vmem:[%s446 + $0x60] sm:$0xff]
        %v456 = vld [vmem:[%s446 + $0x68] sm:$0xff]
        %v457 = vld [vmem:[%s446 + $0x78] sm:$0xff]
        %v458 = vld [vmem:[%s446 + $0x80] sm:$0xff]
        %v459 = vld [vmem:[%s446 + $0x90] sm:$0xff]
        %v460 = vld [vmem:[%s446 + $0x98] sm:$0xff]
        %v461 = vld [vmem:[%s446 + $0xa8] sm:$0xff]
        %v462 = vld [vmem:[%s446 + $0xb0] sm:$0xff]
        %v463 = vld [vmem:[%s446 + $0x1] sm:$0xff]
        %v464 = vld [vmem:[%s446 + $0x9] sm:$0xff]
        %v465 = vld [vmem:[%s446 + $0x19] sm:$0xff]
        %v466 = vld [vmem:[%s446 + $0x21] sm:$0xff]
        %v467 = vld [vmem:[%s446 + $0x31] sm:$0xff]
        %v468 = vld [vmem:[%s446 + $0x39] sm:$0xff]
        %v469 = vld [vmem:[%s446 + $0x49] sm:$0xff]
        %v470 = vld [vmem:[%s446 + $0x51] sm:$0xff]
        %v471 = vld [vmem:[%s446 + $0x61] sm:$0xff]
        %v472 = vld [vmem:[%s446 + $0x69] sm:$0xff]
        %v473 = vld [vmem:[%s446 + $0x79] sm:$0xff]
        %v474 = vld [vmem:[%s446 + $0x81] sm:$0xff]
        %v475 = vld [vmem:[%s446 + $0x91] sm:$0xff]
        %v476 = vld [vmem:[%s446 + $0x99] sm:$0xff]
        %v477 = vld [vmem:[%s446 + $0xa9] sm:$0xff]
        %v478 = vld [vmem:[%s446 + $0xb1] sm:$0xff]
        %v479 = vld [vmem:[%s446 + $0x2] sm:$0xff]
        %v480 = vld [vmem:[%s446 + $0xa] sm:$0xff]
        %v481 = vld [vmem:[%s446 + $0x1a] sm:$0xff]
        %v482 = vld [vmem:[%s446 + $0x22] sm:$0xff]
        %v483 = vld [vmem:[%s446 + $0x32] sm:$0xff]
        %v484 = vld [vmem:[%s446 + $0x3a] sm:$0xff]
        %v485 = vld [vmem:[%s446 + $0x4a] sm:$0xff]
        %v486 = vld [vmem:[%s446 + $0x52] sm:$0xff]
        %v487 = vld [vmem:[%s446 + $0x62] sm:$0xff]
        %v488 = vld [vmem:[%s446 + $0x6a] sm:$0xff]
        %v489 = vld [vmem:[%s446 + $0x7a] sm:$0xff]
        %v490 = vld [vmem:[%s446 + $0x82] sm:$0xff]
        %v491 = vld [vmem:[%s446 + $0x92] sm:$0xff]
        %v492 = vld [vmem:[%s446 + $0x9a] sm:$0xff]
        %v493 = vld [vmem:[%s446 + $0xaa] sm:$0xff]
        %v494 = vld [vmem:[%s446 + $0xb2] sm:$0xff]
        %511 = vrot.lane.b32.xlu0 %v412, 4
        %v512 = vpop.permute.xlu0 %511
        %513 = vrot.lane.b32.xlu0 %v413, 4
        %v514 = vpop.permute.xlu0 %513
        %515 = vrot.lane.b32.xlu0 %v414, 4
        %v516 = vpop.permute.xlu0 %515
        %517 = vrot.lane.b32.xlu0 %v415, 4
        %v518 = vpop.permute.xlu0 %517
        %519 = vrot.lane.b32.xlu0 %v416, 4
        %v520 = vpop.permute.xlu0 %519
        %521 = vrot.lane.b32.xlu0 %v417, 4
        %v522 = vpop.permute.xlu0 %521
        %523 = vrot.lane.b32.xlu0 %v418, 4
        %v524 = vpop.permute.xlu0 %523
        %525 = vrot.lane.b32.xlu0 %v419, 4
        %v526 = vpop.permute.xlu0 %525
        %527 = vrot.lane.b32.xlu0 %v420, 4
        %v528 = vpop.permute.xlu0 %527
        %529 = vrot.lane.b32.xlu0 %v421, 4
        %v530 = vpop.permute.xlu0 %529
        %531 = vrot.lane.b32.xlu0 %v422, 4
        %v532 = vpop.permute.xlu0 %531
        %533 = vrot.lane.b32.xlu0 %v423, 4
        %v534 = vpop.permute.xlu0 %533
        %535 = vrot.lane.b32.xlu0 %v424, 4
        %v536 = vpop.permute.xlu0 %535
        %537 = vrot.lane.b32.xlu0 %v425, 4
        %v538 = vpop.permute.xlu0 %537
        %539 = vrot.lane.b32.xlu0 %v426, 4
        %v540 = vpop.permute.xlu0 %539
        %541 = vrot.lane.b32.xlu0 %v427, 4
        %v542 = vpop.permute.xlu0 %541
        %575 = vrot.lane.b32.xlu0 %v428, 8
        %v576 = vpop.permute.xlu0 %575
        %577 = vrot.lane.b32.xlu0 %v429, 8
        %v578 = vpop.permute.xlu0 %577
        %579 = vrot.lane.b32.xlu0 %v430, 8
        %v580 = vpop.permute.xlu0 %579
        %581 = vrot.lane.b32.xlu0 %v431, 8
        %v582 = vpop.permute.xlu0 %581
        %583 = vrot.lane.b32.xlu0 %v432, 8
        %v584 = vpop.permute.xlu0 %583
        %585 = vrot.lane.b32.xlu0 %v433, 8
        %v586 = vpop.permute.xlu0 %585
        %587 = vrot.lane.b32.xlu0 %v434, 8
        %v588 = vpop.permute.xlu0 %587
        %589 = vrot.lane.b32.xlu0 %v435, 8
        %v590 = vpop.permute.xlu0 %589
        %591 = vrot.lane.b32.xlu0 %v436, 8
        %v592 = vpop.permute.xlu0 %591
        %593 = vrot.lane.b32.xlu0 %v437, 8
        %v594 = vpop.permute.xlu0 %593
        %595 = vrot.lane.b32.xlu0 %v438, 8
        %v596 = vpop.permute.xlu0 %595
        %597 = vrot.lane.b32.xlu0 %v439, 8
        %v598 = vpop.permute.xlu0 %597
        %599 = vrot.lane.b32.xlu0 %v440, 8
        %v600 = vpop.permute.xlu0 %599
        %601 = vrot.lane.b32.xlu0 %v441, 8
        %v602 = vpop.permute.xlu0 %601
        %603 = vrot.lane.b32.xlu0 %v442, 8
        %v604 = vpop.permute.xlu0 %603
        %605 = vrot.lane.b32.xlu0 %v443, 8
        %v606 = vpop.permute.xlu0 %605
        %639 = vrot.lane.b32.xlu0 %v447, 12
        %v640 = vpop.permute.xlu0 %639
        %641 = vrot.lane.b32.xlu0 %v448, 12
        %v642 = vpop.permute.xlu0 %641
        %643 = vrot.lane.b32.xlu0 %v449, 12
        %v644 = vpop.permute.xlu0 %643
        %645 = vrot.lane.b32.xlu0 %v450, 12
        %v646 = vpop.permute.xlu0 %645
        %647 = vrot.lane.b32.xlu0 %v451, 12
        %v648 = vpop.permute.xlu0 %647
        %649 = vrot.lane.b32.xlu0 %v452, 12
        %v650 = vpop.permute.xlu0 %649
        %651 = vrot.lane.b32.xlu0 %v453, 12
        %v652 = vpop.permute.xlu0 %651
        %653 = vrot.lane.b32.xlu0 %v454, 12
        %v654 = vpop.permute.xlu0 %653
        %655 = vrot.lane.b32.xlu0 %v455, 12
        %v656 = vpop.permute.xlu0 %655
        %657 = vrot.lane.b32.xlu0 %v456, 12
        %v658 = vpop.permute.xlu0 %657
        %659 = vrot.lane.b32.xlu0 %v457, 12
        %v660 = vpop.permute.xlu0 %659
        %661 = vrot.lane.b32.xlu0 %v458, 12
        %v662 = vpop.permute.xlu0 %661
        %663 = vrot.lane.b32.xlu0 %v459, 12
        %v664 = vpop.permute.xlu0 %663
        %665 = vrot.lane.b32.xlu0 %v460, 12
        %v666 = vpop.permute.xlu0 %665
        %667 = vrot.lane.b32.xlu0 %v461, 12
        %v668 = vpop.permute.xlu0 %667
        %669 = vrot.lane.b32.xlu0 %v462, 12
        %v670 = vpop.permute.xlu0 %669
        %703 = vrot.lane.b32.xlu0 %v463, 16
        %v704 = vpop.permute.xlu0 %703
        %705 = vrot.lane.b32.xlu0 %v464, 16
        %v706 = vpop.permute.xlu0 %705
        %707 = vrot.lane.b32.xlu0 %v465, 16
        %v708 = vpop.permute.xlu0 %707
        %709 = vrot.lane.b32.xlu0 %v466, 16
        %v710 = vpop.permute.xlu0 %709
        %711 = vrot.lane.b32.xlu0 %v467, 16
        %v712 = vpop.permute.xlu0 %711
        %713 = vrot.lane.b32.xlu0 %v468, 16
        %v714 = vpop.permute.xlu0 %713
        %715 = vrot.lane.b32.xlu0 %v469, 16
        %v716 = vpop.permute.xlu0 %715
        %717 = vrot.lane.b32.xlu0 %v470, 16
        %v718 = vpop.permute.xlu0 %717
        %719 = vrot.lane.b32.xlu0 %v471, 16
        %v720 = vpop.permute.xlu0 %719
        %721 = vrot.lane.b32.xlu0 %v472, 16
        %v722 = vpop.permute.xlu0 %721
        %723 = vrot.lane.b32.xlu0 %v473, 16
        %v724 = vpop.permute.xlu0 %723
        %725 = vrot.lane.b32.xlu0 %v474, 16
        %v726 = vpop.permute.xlu0 %725
        %727 = vrot.lane.b32.xlu0 %v475, 16
        %v728 = vpop.permute.xlu0 %727
        %729 = vrot.lane.b32.xlu0 %v476, 16
        %v730 = vpop.permute.xlu0 %729
        %731 = vrot.lane.b32.xlu0 %v477, 16
        %v732 = vpop.permute.xlu0 %731
        %733 = vrot.lane.b32.xlu0 %v478, 16
        %v734 = vpop.permute.xlu0 %733
        %767 = vrot.lane.b32.xlu0 %v479, 20
        %v768 = vpop.permute.xlu0 %767
        %769 = vrot.lane.b32.xlu0 %v480, 20
        %v770 = vpop.permute.xlu0 %769
        %771 = vrot.lane.b32.xlu0 %v481, 20
        %v772 = vpop.permute.xlu0 %771
        %773 = vrot.lane.b32.xlu0 %v482, 20
        %v774 = vpop.permute.xlu0 %773
        %775 = vrot.lane.b32.xlu0 %v483, 20
        %v776 = vpop.permute.xlu0 %775
        %777 = vrot.lane.b32.xlu0 %v484, 20
        %v778 = vpop.permute.xlu0 %777
        %779 = vrot.lane.b32.xlu0 %v485, 20
        %v780 = vpop.permute.xlu0 %779
        %781 = vrot.lane.b32.xlu0 %v486, 20
        %v782 = vpop.permute.xlu0 %781
        %783 = vrot.lane.b32.xlu0 %v487, 20
        %v784 = vpop.permute.xlu0 %783
        %785 = vrot.lane.b32.xlu0 %v488, 20
        %v786 = vpop.permute.xlu0 %785
        %787 = vrot.lane.b32.xlu0 %v489, 20
        %v788 = vpop.permute.xlu0 %787
        %789 = vrot.lane.b32.xlu0 %v490, 20
        %v790 = vpop.permute.xlu0 %789
        %791 = vrot.lane.b32.xlu0 %v491, 20
        %v792 = vpop.permute.xlu0 %791
        %793 = vrot.lane.b32.xlu0 %v492, 20
        %v794 = vpop.permute.xlu0 %793
        %795 = vrot.lane.b32.xlu0 %v493, 20
        %v796 = vpop.permute.xlu0 %795
        %797 = vrot.lane.b32.xlu0 %v494, 20
        %v798 = vpop.permute.xlu0 %797
        %vm815 = vcmask 31744
        %v816 = vsel %vm815, %v396, %v512
        %v817 = vsel %vm815, %v397, %v514
        %v818 = vsel %vm815, %v398, %v516
        %v819 = vsel %vm815, %v399, %v518
        %v820 = vsel %vm815, %v400, %v520
        %v821 = vsel %vm815, %v401, %v522
        %v822 = vsel %vm815, %v402, %v524
        %v823 = vsel %vm815, %v403, %v526
        %v824 = vsel %vm815, %v404, %v528
        %v825 = vsel %vm815, %v405, %v530
        %v826 = vsel %vm815, %v406, %v532
        %v827 = vsel %vm815, %v407, %v534
        %v828 = vsel %vm815, %v408, %v536
        %v829 = vsel %vm815, %v409, %v538
        %v830 = vsel %vm815, %v410, %v540
        %v831 = vsel %vm815, %v411, %v542
        %vm832 = vcmask 64512
        %v833 = vsel %vm832, %v816, %v576
        %v834 = vsel %vm832, %v817, %v578
        %v835 = vsel %vm832, %v818, %v580
        %v836 = vsel %vm832, %v819, %v582
        %v837 = vsel %vm832, %v820, %v584
        %v838 = vsel %vm832, %v821, %v586
        %v839 = vsel %vm832, %v822, %v588
        %v840 = vsel %vm832, %v823, %v590
        %v841 = vsel %vm832, %v824, %v592
        %v842 = vsel %vm832, %v825, %v594
        %v843 = vsel %vm832, %v826, %v596
        %v844 = vsel %vm832, %v827, %v598
        %v845 = vsel %vm832, %v828, %v600
        %v846 = vsel %vm832, %v829, %v602
        %v847 = vsel %vm832, %v830, %v604
        %v848 = vsel %vm832, %v831, %v606
        %vm849 = vcmask 97280
        %v850 = vsel %vm849, %v833, %v640
        %v851 = vsel %vm849, %v834, %v642
        %v852 = vsel %vm849, %v835, %v644
        %v853 = vsel %vm849, %v836, %v646
        %v854 = vsel %vm849, %v837, %v648
        %v855 = vsel %vm849, %v838, %v650
        %v856 = vsel %vm849, %v839, %v652
        %v857 = vsel %vm849, %v840, %v654
        %v858 = vsel %vm849, %v841, %v656
        %v859 = vsel %vm849, %v842, %v658
        %v860 = vsel %vm849, %v843, %v660
        %v861 = vsel %vm849, %v844, %v662
        %v862 = vsel %vm849, %v845, %v664
        %v863 = vsel %vm849, %v846, %v666
        %v864 = vsel %vm849, %v847, %v668
        %v865 = vsel %vm849, %v848, %v670
        %vm866 = vcmask 130048
        %v867 = vsel %vm866, %v850, %v704
        %v868 = vsel %vm866, %v851, %v706
        %v869 = vsel %vm866, %v852, %v708
        %v870 = vsel %vm866, %v853, %v710
        %v871 = vsel %vm866, %v854, %v712
        %v872 = vsel %vm866, %v855, %v714
        %v873 = vsel %vm866, %v856, %v716
        %v874 = vsel %vm866, %v857, %v718
        %v875 = vsel %vm866, %v858, %v720
        %v876 = vsel %vm866, %v859, %v722
        %v877 = vsel %vm866, %v860, %v724
        %v878 = vsel %vm866, %v861, %v726
        %v879 = vsel %vm866, %v862, %v728
        %v880 = vsel %vm866, %v863, %v730
        %v881 = vsel %vm866, %v864, %v732
        %v882 = vsel %vm866, %v865, %v734
        %vm883 = vcmask 162816
        %v884 = vsel %vm883, %v867, %v768
        %v885 = vsel %vm883, %v868, %v770
        %v886 = vsel %vm883, %v869, %v772
        %v887 = vsel %vm883, %v870, %v774
        %v888 = vsel %vm883, %v871, %v776
        %v889 = vsel %vm883, %v872, %v778
        %v890 = vsel %vm883, %v873, %v780
        %v891 = vsel %vm883, %v874, %v782
        %v892 = vsel %vm883, %v875, %v784
        %v893 = vsel %vm883, %v876, %v786
        %v894 = vsel %vm883, %v877, %v788
        %v895 = vsel %vm883, %v878, %v790
        %v896 = vsel %vm883, %v879, %v792
        %v897 = vsel %vm883, %v880, %v794
        %v898 = vsel %vm883, %v881, %v796
        %v899 = vsel %vm883, %v882, %v798
        %v900 = vld [vmem:[%s1] sm:$0xff]
        %v901 = vld [vmem:[%s1 + $0x8] sm:$0xff]
        %v902 = vld [vmem:[%s1 + $0x10] sm:$0xff]
        %v904 = vperm.slane %v392, 0
        %vm906 = vcmask 195584
        %v908 = vsel %vm906, %v884, 0
        %v911 = vsel %vm906, %v885, 0
        %v914 = vsel %vm906, %v886, 0
        %v917 = vsel %vm906, %v887, 0
        %v920 = vsel %vm906, %v888, 0
        %v923 = vsel %vm906, %v889, 0
        %v926 = vsel %vm906, %v890, 0
        %v929 = vsel %vm906, %v891, 0
        %v932 = vsel %vm906, %v892, 0
        %v935 = vsel %vm906, %v893, 0
        %v938 = vsel %vm906, %v894, 0
        %v941 = vsel %vm906, %v895, 0
        %v944 = vsel %vm906, %v896, 0
        %v947 = vsel %vm906, %v897, 0
        %v950 = vsel %vm906, %v898, 0
        %v953 = vsel %vm906, %v899, 0
        %955 = vmatpush.msra.mxu0 0.0
        %956 = vmatpush.msra.mxu0 0.0
        %957 = vmatpush.msra.mxu0 0.0
        %958 = vmatpush.msra.mxu0 0.0
        %959 = vmatpush.msra.mxu0 0.0
        %960 = vmatpush.msra.mxu0 0.0
        %961 = vmatpush.msra.mxu0 0.0
        %962 = vmatpush.msra.mxu0 0.0
        %963 = vmatpush.msra.mxu0 0.0
        %964 = vmatpush.msra.mxu0 0.0
        %965 = vmatpush.msra.mxu0 0.0
        %966 = vmatpush.msra.mxu0 0.0
        %967 = vmatpush.msra.mxu0 0.0
        %968 = vmatpush.msra.mxu0 %v902
        %969 = vmatpush.msra.mxu0 %v901
        %970 = vmatpush.msra.mxu0 %v900
        %971 = vmatmul.f32.gmra.mxu0 %v908
        %v972 = vpop.f32.mrf.mxu0
        %v973 = vadd.f32 %v904, %v972
        %974 = vmatmul.f32.gmra.mxu0 %v911
        %v975 = vpop.f32.mrf.mxu0
        %v976 = vadd.f32 %v904, %v975
        %977 = vmatmul.f32.gmra.mxu0 %v914
        %v978 = vpop.f32.mrf.mxu0
        %v979 = vadd.f32 %v904, %v978
        %980 = vmatmul.f32.gmra.mxu0 %v917
        %v981 = vpop.f32.mrf.mxu0
        %v982 = vadd.f32 %v904, %v981
        %983 = vmatmul.f32.gmra.mxu0 %v920
        %v984 = vpop.f32.mrf.mxu0
        %v985 = vadd.f32 %v904, %v984
        %986 = vmatmul.f32.gmra.mxu0 %v923
        %v987 = vpop.f32.mrf.mxu0
        %v988 = vadd.f32 %v904, %v987
        %989 = vmatmul.f32.gmra.mxu0 %v926
        %v990 = vpop.f32.mrf.mxu0
        %v991 = vadd.f32 %v904, %v990
        %992 = vmatmul.f32.gmra.mxu0 %v929
        %v993 = vpop.f32.mrf.mxu0
        %v994 = vadd.f32 %v904, %v993
        %995 = vmatmul.f32.gmra.mxu0 %v932
        %v996 = vpop.f32.mrf.mxu0
        %v997 = vadd.f32 %v904, %v996
        %998 = vmatmul.f32.gmra.mxu0 %v935
        %v999 = vpop.f32.mrf.mxu0
        %v1000 = vadd.f32 %v904, %v999
        %1001 = vmatmul.f32.gmra.mxu0 %v938
        %v1002 = vpop.f32.mrf.mxu0
        %v1003 = vadd.f32 %v904, %v1002
        %1004 = vmatmul.f32.gmra.mxu0 %v941
        %v1005 = vpop.f32.mrf.mxu0
        %v1006 = vadd.f32 %v904, %v1005
        %1007 = vmatmul.f32.gmra.mxu0 %v944
        %v1008 = vpop.f32.mrf.mxu0
        %v1009 = vadd.f32 %v904, %v1008
        %1010 = vmatmul.f32.gmra.mxu0 %v947
        %v1011 = vpop.f32.mrf.mxu0
        %v1012 = vadd.f32 %v904, %v1011
        %1013 = vmatmul.f32.gmra.mxu0 %v950
        %v1014 = vpop.f32.mrf.mxu0
        %v1015 = vadd.f32 %v904, %v1014
        %1016 = vmatmul.f32.gmra.mxu0 %v953
        %v1017 = vpop.f32.mrf.mxu0
        %v1018 = vadd.f32 %v904, %v1017
        %1019 = vdwg.mxu0
        %v1020 = vmax.f32 %v973, 0.0
        %v1021 = vmax.f32 %v976, 0.0
        %v1022 = vmax.f32 %v979, 0.0
        %v1023 = vmax.f32 %v982, 0.0
        %v1024 = vmax.f32 %v985, 0.0
        %v1025 = vmax.f32 %v988, 0.0
        %v1026 = vmax.f32 %v991, 0.0
        %v1027 = vmax.f32 %v994, 0.0
        %v1028 = vmax.f32 %v997, 0.0
        %v1029 = vmax.f32 %v1000, 0.0
        %v1030 = vmax.f32 %v1003, 0.0
        %v1031 = vmax.f32 %v1006, 0.0
        %v1032 = vmax.f32 %v1009, 0.0
        %v1033 = vmax.f32 %v1012, 0.0
        %v1034 = vmax.f32 %v1015, 0.0
        %v1035 = vmax.f32 %v1018, 0.0
        %v1036 = vld [vmem:[%s358] sm:$0xff]
        %v1037 = vld [vmem:[%s358 + $0x8] sm:$0xff]
        %v1038 = vld [vmem:[%s358 + $0x10] sm:$0xff]
        %v1039 = vld [vmem:[%s358 + $0x18] sm:$0xff]
        %v1040 = vld [vmem:[%s358 + $0x20] sm:$0xff]
        %v1041 = vld [vmem:[%s358 + $0x28] sm:$0xff]
        %v1042 = vld [vmem:[%s358 + $0x30] sm:$0xff]
        %v1043 = vld [vmem:[%s358 + $0x38] sm:$0xff]
        %v1044 = vld [vmem:[%s358 + $0x40] sm:$0xff]
        %v1045 = vld [vmem:[%s358 + $0x48] sm:$0xff]
        %v1046 = vld [vmem:[%s358 + $0x50] sm:$0xff]
        %v1047 = vld [vmem:[%s358 + $0x58] sm:$0xff]
        %v1048 = vld [vmem:[%s358 + $0x60] sm:$0xff]
        %v1049 = vld [vmem:[%s358 + $0x68] sm:$0xff]
        %v1050 = vld [vmem:[%s358 + $0x70] sm:$0xff]
        %v1051 = vld [vmem:[%s358 + $0x78] sm:$0xff]
        %v1052 = vadd.f32 %v1020, %v1036
        %v1053 = vadd.f32 %v1021, %v1037
        %v1054 = vadd.f32 %v1022, %v1038
        %v1055 = vadd.f32 %v1023, %v1039
        %v1056 = vadd.f32 %v1024, %v1040
        %v1057 = vadd.f32 %v1025, %v1041
        %v1058 = vadd.f32 %v1026, %v1042
        %v1059 = vadd.f32 %v1027, %v1043
        %v1060 = vadd.f32 %v1028, %v1044
        %v1061 = vadd.f32 %v1029, %v1045
        %v1062 = vadd.f32 %v1030, %v1046
        %v1063 = vadd.f32 %v1031, %v1047
        %v1064 = vadd.f32 %v1032, %v1048
        %v1065 = vadd.f32 %v1033, %v1049
        %v1066 = vadd.f32 %v1034, %v1050
        %v1067 = vadd.f32 %v1035, %v1051
        %1068 = vst.msk [vmem:[%s384] sm:$0xff] %vm815, %v1052
        %1069 = vst.msk [vmem:[%s384 + $0x8] sm:$0xff] %vm815, %v1053
        %1070 = vst.msk [vmem:[%s384 + $0x10] sm:$0xff] %vm815, %v1054
        %1071 = vst.msk [vmem:[%s384 + $0x18] sm:$0xff] %vm815, %v1055
        %1072 = vst.msk [vmem:[%s384 + $0x20] sm:$0xff] %vm815, %v1056
        %1073 = vst.msk [vmem:[%s384 + $0x28] sm:$0xff] %vm815, %v1057
        %1074 = vst.msk [vmem:[%s384 + $0x30] sm:$0xff] %vm815, %v1058
        %1075 = vst.msk [vmem:[%s384 + $0x38] sm:$0xff] %vm815, %v1059
        %1076 = vst.msk [vmem:[%s384 + $0x40] sm:$0xff] %vm815, %v1060
        %1077 = vst.msk [vmem:[%s384 + $0x48] sm:$0xff] %vm815, %v1061
        %1078 = vst.msk [vmem:[%s384 + $0x50] sm:$0xff] %vm815, %v1062
        %1079 = vst.msk [vmem:[%s384 + $0x58] sm:$0xff] %vm815, %v1063
        %1080 = vst.msk [vmem:[%s384 + $0x60] sm:$0xff] %vm815, %v1064
        %1081 = vst.msk [vmem:[%s384 + $0x68] sm:$0xff] %vm815, %v1065
        %1082 = vst.msk [vmem:[%s384 + $0x70] sm:$0xff] %vm815, %v1066
        %1083 = vst.msk [vmem:[%s384 + $0x78] sm:$0xff] %vm815, %v1067
        %v1084 = vld [vmem:[%s446] sm:$0xff]
        %v1085 = vld [vmem:[%s446 + $0x8] sm:$0xff]
        %v1086 = vld [vmem:[%s446 + $0x18] sm:$0xff]
        %v1087 = vld [vmem:[%s446 + $0x20] sm:$0xff]
        %v1088 = vld [vmem:[%s446 + $0x30] sm:$0xff]
        %v1089 = vld [vmem:[%s446 + $0x38] sm:$0xff]
        %v1090 = vld [vmem:[%s446 + $0x48] sm:$0xff]
        %v1091 = vld [vmem:[%s446 + $0x50] sm:$0xff]
        %v1092 = vld [vmem:[%s446 + $0x60] sm:$0xff]
        %v1093 = vld [vmem:[%s446 + $0x68] sm:$0xff]
        %v1094 = vld [vmem:[%s446 + $0x78] sm:$0xff]
        %v1095 = vld [vmem:[%s446 + $0x80] sm:$0xff]
        %v1096 = vld [vmem:[%s446 + $0x90] sm:$0xff]
        %v1097 = vld [vmem:[%s446 + $0x98] sm:$0xff]
        %v1098 = vld [vmem:[%s446 + $0xa8] sm:$0xff]
        %v1099 = vld [vmem:[%s446 + $0xb0] sm:$0xff]
        %v1100 = vld [vmem:[%s446 + $0x1] sm:$0xff]
        %v1101 = vld [vmem:[%s446 + $0x9] sm:$0xff]
        %v1102 = vld [vmem:[%s446 + $0x19] sm:$0xff]
        %v1103 = vld [vmem:[%s446 + $0x21] sm:$0xff]
        %v1104 = vld [vmem:[%s446 + $0x31] sm:$0xff]
        %v1105 = vld [vmem:[%s446 + $0x39] sm:$0xff]
        %v1106 = vld [vmem:[%s446 + $0x49] sm:$0xff]
        %v1107 = vld [vmem:[%s446 + $0x51] sm:$0xff]
        %v1108 = vld [vmem:[%s446 + $0x61] sm:$0xff]
        %v1109 = vld [vmem:[%s446 + $0x69] sm:$0xff]
        %v1110 = vld [vmem:[%s446 + $0x79] sm:$0xff]
        %v1111 = vld [vmem:[%s446 + $0x81] sm:$0xff]
        %v1112 = vld [vmem:[%s446 + $0x91] sm:$0xff]
        %v1113 = vld [vmem:[%s446 + $0x99] sm:$0xff]
        %v1114 = vld [vmem:[%s446 + $0xa9] sm:$0xff]
        %v1115 = vld [vmem:[%s446 + $0xb1] sm:$0xff]
        %v1116 = vld [vmem:[%s446 + $0x2] sm:$0xff]
        %v1117 = vld [vmem:[%s446 + $0xa] sm:$0xff]
        %v1118 = vld [vmem:[%s446 + $0x1a] sm:$0xff]
        %v1119 = vld [vmem:[%s446 + $0x22] sm:$0xff]
        %v1120 = vld [vmem:[%s446 + $0x32] sm:$0xff]
        %v1121 = vld [vmem:[%s446 + $0x3a] sm:$0xff]
        %v1122 = vld [vmem:[%s446 + $0x4a] sm:$0xff]
        %v1123 = vld [vmem:[%s446 + $0x52] sm:$0xff]
        %v1124 = vld [vmem:[%s446 + $0x62] sm:$0xff]
        %v1125 = vld [vmem:[%s446 + $0x6a] sm:$0xff]
        %v1126 = vld [vmem:[%s446 + $0x7a] sm:$0xff]
        %v1127 = vld [vmem:[%s446 + $0x82] sm:$0xff]
        %v1128 = vld [vmem:[%s446 + $0x92] sm:$0xff]
        %v1129 = vld [vmem:[%s446 + $0x9a] sm:$0xff]
        %v1130 = vld [vmem:[%s446 + $0xaa] sm:$0xff]
        %v1131 = vld [vmem:[%s446 + $0xb2] sm:$0xff]
        %s1132 = sadd.s32 %s393, 2
        %s1133 = smul.u32 %s1132, 24
        %s1134 = scalar_lea.vmem %s389, %s1133
        %v1135 = vld [vmem:[%s1134] sm:$0xff]
        %v1136 = vld [vmem:[%s1134 + $0x8] sm:$0xff]
        %v1137 = vld [vmem:[%s1134 + $0x18] sm:$0xff]
        %v1138 = vld [vmem:[%s1134 + $0x20] sm:$0xff]
        %v1139 = vld [vmem:[%s1134 + $0x30] sm:$0xff]
        %v1140 = vld [vmem:[%s1134 + $0x38] sm:$0xff]
        %v1141 = vld [vmem:[%s1134 + $0x48] sm:$0xff]
        %v1142 = vld [vmem:[%s1134 + $0x50] sm:$0xff]
        %v1143 = vld [vmem:[%s1134 + $0x60] sm:$0xff]
        %v1144 = vld [vmem:[%s1134 + $0x68] sm:$0xff]
        %v1145 = vld [vmem:[%s1134 + $0x78] sm:$0xff]
        %v1146 = vld [vmem:[%s1134 + $0x80] sm:$0xff]
        %v1147 = vld [vmem:[%s1134 + $0x90] sm:$0xff]
        %v1148 = vld [vmem:[%s1134 + $0x98] sm:$0xff]
        %v1149 = vld [vmem:[%s1134 + $0xa8] sm:$0xff]
        %v1150 = vld [vmem:[%s1134 + $0xb0] sm:$0xff]
        %v1151 = vld [vmem:[%s1134 + $0x1] sm:$0xff]
        %v1152 = vld [vmem:[%s1134 + $0x9] sm:$0xff]
        %v1153 = vld [vmem:[%s1134 + $0x19] sm:$0xff]
        %v1154 = vld [vmem:[%s1134 + $0x21] sm:$0xff]
        %v1155 = vld [vmem:[%s1134 + $0x31] sm:$0xff]
        %v1156 = vld [vmem:[%s1134 + $0x39] sm:$0xff]
        %v1157 = vld [vmem:[%s1134 + $0x49] sm:$0xff]
        %v1158 = vld [vmem:[%s1134 + $0x51] sm:$0xff]
        %v1159 = vld [vmem:[%s1134 + $0x61] sm:$0xff]
        %v1160 = vld [vmem:[%s1134 + $0x69] sm:$0xff]
        %v1161 = vld [vmem:[%s1134 + $0x79] sm:$0xff]
        %v1162 = vld [vmem:[%s1134 + $0x81] sm:$0xff]
        %v1163 = vld [vmem:[%s1134 + $0x91] sm:$0xff]
        %v1164 = vld [vmem:[%s1134 + $0x99] sm:$0xff]
        %v1165 = vld [vmem:[%s1134 + $0xa9] sm:$0xff]
        %v1166 = vld [vmem:[%s1134 + $0xb1] sm:$0xff]
        %v1167 = vld [vmem:[%s1134 + $0x2] sm:$0xff]
        %v1168 = vld [vmem:[%s1134 + $0xa] sm:$0xff]
        %v1169 = vld [vmem:[%s1134 + $0x1a] sm:$0xff]
        %v1170 = vld [vmem:[%s1134 + $0x22] sm:$0xff]
        %v1171 = vld [vmem:[%s1134 + $0x32] sm:$0xff]
        %v1172 = vld [vmem:[%s1134 + $0x3a] sm:$0xff]
        %v1173 = vld [vmem:[%s1134 + $0x4a] sm:$0xff]
        %v1174 = vld [vmem:[%s1134 + $0x52] sm:$0xff]
        %v1175 = vld [vmem:[%s1134 + $0x62] sm:$0xff]
        %v1176 = vld [vmem:[%s1134 + $0x6a] sm:$0xff]
        %v1177 = vld [vmem:[%s1134 + $0x7a] sm:$0xff]
        %v1178 = vld [vmem:[%s1134 + $0x82] sm:$0xff]
        %v1179 = vld [vmem:[%s1134 + $0x92] sm:$0xff]
        %v1180 = vld [vmem:[%s1134 + $0x9a] sm:$0xff]
        %v1181 = vld [vmem:[%s1134 + $0xaa] sm:$0xff]
        %v1182 = vld [vmem:[%s1134 + $0xb2] sm:$0xff]
        %1199 = vrot.lane.b32.xlu0 %v1100, 4
        %v1200 = vpop.permute.xlu0 %1199
        %1201 = vrot.lane.b32.xlu0 %v1101, 4
        %v1202 = vpop.permute.xlu0 %1201
        %1203 = vrot.lane.b32.xlu0 %v1102, 4
        %v1204 = vpop.permute.xlu0 %1203
        %1205 = vrot.lane.b32.xlu0 %v1103, 4
        %v1206 = vpop.permute.xlu0 %1205
        %1207 = vrot.lane.b32.xlu0 %v1104, 4
        %v1208 = vpop.permute.xlu0 %1207
        %1209 = vrot.lane.b32.xlu0 %v1105, 4
        %v1210 = vpop.permute.xlu0 %1209
        %1211 = vrot.lane.b32.xlu0 %v1106, 4
        %v1212 = vpop.permute.xlu0 %1211
        %1213 = vrot.lane.b32.xlu0 %v1107, 4
        %v1214 = vpop.permute.xlu0 %1213
        %1215 = vrot.lane.b32.xlu0 %v1108, 4
        %v1216 = vpop.permute.xlu0 %1215
        %1217 = vrot.lane.b32.xlu0 %v1109, 4
        %v1218 = vpop.permute.xlu0 %1217
        %1219 = vrot.lane.b32.xlu0 %v1110, 4
        %v1220 = vpop.permute.xlu0 %1219
        %1221 = vrot.lane.b32.xlu0 %v1111, 4
        %v1222 = vpop.permute.xlu0 %1221
        %1223 = vrot.lane.b32.xlu0 %v1112, 4
        %v1224 = vpop.permute.xlu0 %1223
        %1225 = vrot.lane.b32.xlu0 %v1113, 4
        %v1226 = vpop.permute.xlu0 %1225
        %1227 = vrot.lane.b32.xlu0 %v1114, 4
        %v1228 = vpop.permute.xlu0 %1227
        %1229 = vrot.lane.b32.xlu0 %v1115, 4
        %v1230 = vpop.permute.xlu0 %1229
        %1263 = vrot.lane.b32.xlu0 %v1116, 8
        %v1264 = vpop.permute.xlu0 %1263
        %1265 = vrot.lane.b32.xlu0 %v1117, 8
        %v1266 = vpop.permute.xlu0 %1265
        %1267 = vrot.lane.b32.xlu0 %v1118, 8
        %v1268 = vpop.permute.xlu0 %1267
        %1269 = vrot.lane.b32.xlu0 %v1119, 8
        %v1270 = vpop.permute.xlu0 %1269
        %1271 = vrot.lane.b32.xlu0 %v1120, 8
        %v1272 = vpop.permute.xlu0 %1271
        %1273 = vrot.lane.b32.xlu0 %v1121, 8
        %v1274 = vpop.permute.xlu0 %1273
        %1275 = vrot.lane.b32.xlu0 %v1122, 8
        %v1276 = vpop.permute.xlu0 %1275
        %1277 = vrot.lane.b32.xlu0 %v1123, 8
        %v1278 = vpop.permute.xlu0 %1277
        %1279 = vrot.lane.b32.xlu0 %v1124, 8
        %v1280 = vpop.permute.xlu0 %1279
        %1281 = vrot.lane.b32.xlu0 %v1125, 8
        %v1282 = vpop.permute.xlu0 %1281
        %1283 = vrot.lane.b32.xlu0 %v1126, 8
        %v1284 = vpop.permute.xlu0 %1283
        %1285 = vrot.lane.b32.xlu0 %v1127, 8
        %v1286 = vpop.permute.xlu0 %1285
        %1287 = vrot.lane.b32.xlu0 %v1128, 8
        %v1288 = vpop.permute.xlu0 %1287
        %1289 = vrot.lane.b32.xlu0 %v1129, 8
        %v1290 = vpop.permute.xlu0 %1289
        %1291 = vrot.lane.b32.xlu0 %v1130, 8
        %v1292 = vpop.permute.xlu0 %1291
        %1293 = vrot.lane.b32.xlu0 %v1131, 8
        %v1294 = vpop.permute.xlu0 %1293
        %1327 = vrot.lane.b32.xlu0 %v1135, 12
        %v1328 = vpop.permute.xlu0 %1327
        %1329 = vrot.lane.b32.xlu0 %v1136, 12
        %v1330 = vpop.permute.xlu0 %1329
        %1331 = vrot.lane.b32.xlu0 %v1137, 12
        %v1332 = vpop.permute.xlu0 %1331
        %1333 = vrot.lane.b32.xlu0 %v1138, 12
        %v1334 = vpop.permute.xlu0 %1333
        %1335 = vrot.lane.b32.xlu0 %v1139, 12
        %v1336 = vpop.permute.xlu0 %1335
        %1337 = vrot.lane.b32.xlu0 %v1140, 12
        %v1338 = vpop.permute.xlu0 %1337
        %1339 = vrot.lane.b32.xlu0 %v1141, 12
        %v1340 = vpop.permute.xlu0 %1339
        %1341 = vrot.lane.b32.xlu0 %v1142, 12
        %v1342 = vpop.permute.xlu0 %1341
        %1343 = vrot.lane.b32.xlu0 %v1143, 12
        %v1344 = vpop.permute.xlu0 %1343
        %1345 = vrot.lane.b32.xlu0 %v1144, 12
        %v1346 = vpop.permute.xlu0 %1345
        %1347 = vrot.lane.b32.xlu0 %v1145, 12
        %v1348 = vpop.permute.xlu0 %1347
        %1349 = vrot.lane.b32.xlu0 %v1146, 12
        %v1350 = vpop.permute.xlu0 %1349
        %1351 = vrot.lane.b32.xlu0 %v1147, 12
        %v1352 = vpop.permute.xlu0 %1351
        %1353 = vrot.lane.b32.xlu0 %v1148, 12
        %v1354 = vpop.permute.xlu0 %1353
        %1355 = vrot.lane.b32.xlu0 %v1149, 12
        %v1356 = vpop.permute.xlu0 %1355
        %1357 = vrot.lane.b32.xlu0 %v1150, 12
        %v1358 = vpop.permute.xlu0 %1357
        %1391 = vrot.lane.b32.xlu0 %v1151, 16
        %v1392 = vpop.permute.xlu0 %1391
        %1393 = vrot.lane.b32.xlu0 %v1152, 16
        %v1394 = vpop.permute.xlu0 %1393
        %1395 = vrot.lane.b32.xlu0 %v1153, 16
        %v1396 = vpop.permute.xlu0 %1395
        %1397 = vrot.lane.b32.xlu0 %v1154, 16
        %v1398 = vpop.permute.xlu0 %1397
        %1399 = vrot.lane.b32.xlu0 %v1155, 16
        %v1400 = vpop.permute.xlu0 %1399
        %1401 = vrot.lane.b32.xlu0 %v1156, 16
        %v1402 = vpop.permute.xlu0 %1401
        %1403 = vrot.lane.b32.xlu0 %v1157, 16
        %v1404 = vpop.permute.xlu0 %1403
        %1405 = vrot.lane.b32.xlu0 %v1158, 16
        %v1406 = vpop.permute.xlu0 %1405
        %1407 = vrot.lane.b32.xlu0 %v1159, 16
        %v1408 = vpop.permute.xlu0 %1407
        %1409 = vrot.lane.b32.xlu0 %v1160, 16
        %v1410 = vpop.permute.xlu0 %1409
        %1411 = vrot.lane.b32.xlu0 %v1161, 16
        %v1412 = vpop.permute.xlu0 %1411
        %1413 = vrot.lane.b32.xlu0 %v1162, 16
        %v1414 = vpop.permute.xlu0 %1413
        %1415 = vrot.lane.b32.xlu0 %v1163, 16
        %v1416 = vpop.permute.xlu0 %1415
        %1417 = vrot.lane.b32.xlu0 %v1164, 16
        %v1418 = vpop.permute.xlu0 %1417
        %1419 = vrot.lane.b32.xlu0 %v1165, 16
        %v1420 = vpop.permute.xlu0 %1419
        %1421 = vrot.lane.b32.xlu0 %v1166, 16
        %v1422 = vpop.permute.xlu0 %1421
        %1455 = vrot.lane.b32.xlu0 %v1167, 20
        %v1456 = vpop.permute.xlu0 %1455
        %1457 = vrot.lane.b32.xlu0 %v1168, 20
        %v1458 = vpop.permute.xlu0 %1457
        %1459 = vrot.lane.b32.xlu0 %v1169, 20
        %v1460 = vpop.permute.xlu0 %1459
        %1461 = vrot.lane.b32.xlu0 %v1170, 20
        %v1462 = vpop.permute.xlu0 %1461
        %1463 = vrot.lane.b32.xlu0 %v1171, 20
        %v1464 = vpop.permute.xlu0 %1463
        %1465 = vrot.lane.b32.xlu0 %v1172, 20
        %v1466 = vpop.permute.xlu0 %1465
        %1467 = vrot.lane.b32.xlu0 %v1173, 20
        %v1468 = vpop.permute.xlu0 %1467
        %1469 = vrot.lane.b32.xlu0 %v1174, 20
        %v1470 = vpop.permute.xlu0 %1469
        %1471 = vrot.lane.b32.xlu0 %v1175, 20
        %v1472 = vpop.permute.xlu0 %1471
        %1473 = vrot.lane.b32.xlu0 %v1176, 20
        %v1474 = vpop.permute.xlu0 %1473
        %1475 = vrot.lane.b32.xlu0 %v1177, 20
        %v1476 = vpop.permute.xlu0 %1475
        %1477 = vrot.lane.b32.xlu0 %v1178, 20
        %v1478 = vpop.permute.xlu0 %1477
        %1479 = vrot.lane.b32.xlu0 %v1179, 20
        %v1480 = vpop.permute.xlu0 %1479
        %1481 = vrot.lane.b32.xlu0 %v1180, 20
        %v1482 = vpop.permute.xlu0 %1481
        %1483 = vrot.lane.b32.xlu0 %v1181, 20
        %v1484 = vpop.permute.xlu0 %1483
        %1485 = vrot.lane.b32.xlu0 %v1182, 20
        %v1486 = vpop.permute.xlu0 %1485
        %v1503 = vsel %vm815, %v1084, %v1200
        %v1504 = vsel %vm815, %v1085, %v1202
        %v1505 = vsel %vm815, %v1086, %v1204
        %v1506 = vsel %vm815, %v1087, %v1206
        %v1507 = vsel %vm815, %v1088, %v1208
        %v1508 = vsel %vm815, %v1089, %v1210
        %v1509 = vsel %vm815, %v1090, %v1212
        %v1510 = vsel %vm815, %v1091, %v1214
        %v1511 = vsel %vm815, %v1092, %v1216
        %v1512 = vsel %vm815, %v1093, %v1218
        %v1513 = vsel %vm815, %v1094, %v1220
        %v1514 = vsel %vm815, %v1095, %v1222
        %v1515 = vsel %vm815, %v1096, %v1224
        %v1516 = vsel %vm815, %v1097, %v1226
        %v1517 = vsel %vm815, %v1098, %v1228
        %v1518 = vsel %vm815, %v1099, %v1230
        %v1519 = vsel %vm832, %v1503, %v1264
        %v1520 = vsel %vm832, %v1504, %v1266
        %v1521 = vsel %vm832, %v1505, %v1268
        %v1522 = vsel %vm832, %v1506, %v1270
        %v1523 = vsel %vm832, %v1507, %v1272
        %v1524 = vsel %vm832, %v1508, %v1274
        %v1525 = vsel %vm832, %v1509, %v1276
        %v1526 = vsel %vm832, %v1510, %v1278
        %v1527 = vsel %vm832, %v1511, %v1280
        %v1528 = vsel %vm832, %v1512, %v1282
        %v1529 = vsel %vm832, %v1513, %v1284
        %v1530 = vsel %vm832, %v1514, %v1286
        %v1531 = vsel %vm832, %v1515, %v1288
        %v1532 = vsel %vm832, %v1516, %v1290
        %v1533 = vsel %vm832, %v1517, %v1292
        %v1534 = vsel %vm832, %v1518, %v1294
        %v1535 = vsel %vm849, %v1519, %v1328
        %v1536 = vsel %vm849, %v1520, %v1330
        %v1537 = vsel %vm849, %v1521, %v1332
        %v1538 = vsel %vm849, %v1522, %v1334
        %v1539 = vsel %vm849, %v1523, %v1336
        %v1540 = vsel %vm849, %v1524, %v1338
        %v1541 = vsel %vm849, %v1525, %v1340
        %v1542 = vsel %vm849, %v1526, %v1342
        %v1543 = vsel %vm849, %v1527, %v1344
        %v1544 = vsel %vm849, %v1528, %v1346
        %v1545 = vsel %vm849, %v1529, %v1348
        %v1546 = vsel %vm849, %v1530, %v1350
        %v1547 = vsel %vm849, %v1531, %v1352
        %v1548 = vsel %vm849, %v1532, %v1354
        %v1549 = vsel %vm849, %v1533, %v1356
        %v1550 = vsel %vm849, %v1534, %v1358
        %v1551 = vsel %vm866, %v1535, %v1392
        %v1552 = vsel %vm866, %v1536, %v1394
        %v1553 = vsel %vm866, %v1537, %v1396
        %v1554 = vsel %vm866, %v1538, %v1398
        %v1555 = vsel %vm866, %v1539, %v1400
        %v1556 = vsel %vm866, %v1540, %v1402
        %v1557 = vsel %vm866, %v1541, %v1404
        %v1558 = vsel %vm866, %v1542, %v1406
        %v1559 = vsel %vm866, %v1543, %v1408
        %v1560 = vsel %vm866, %v1544, %v1410
        %v1561 = vsel %vm866, %v1545, %v1412
        %v1562 = vsel %vm866, %v1546, %v1414
        %v1563 = vsel %vm866, %v1547, %v1416
        %v1564 = vsel %vm866, %v1548, %v1418
        %v1565 = vsel %vm866, %v1549, %v1420
        %v1566 = vsel %vm866, %v1550, %v1422
        %v1567 = vsel %vm883, %v1551, %v1456
        %v1568 = vsel %vm883, %v1552, %v1458
        %v1569 = vsel %vm883, %v1553, %v1460
        %v1570 = vsel %vm883, %v1554, %v1462
        %v1571 = vsel %vm883, %v1555, %v1464
        %v1572 = vsel %vm883, %v1556, %v1466
        %v1573 = vsel %vm883, %v1557, %v1468
        %v1574 = vsel %vm883, %v1558, %v1470
        %v1575 = vsel %vm883, %v1559, %v1472
        %v1576 = vsel %vm883, %v1560, %v1474
        %v1577 = vsel %vm883, %v1561, %v1476
        %v1578 = vsel %vm883, %v1562, %v1478
        %v1579 = vsel %vm883, %v1563, %v1480
        %v1580 = vsel %vm883, %v1564, %v1482
        %v1581 = vsel %vm883, %v1565, %v1484
        %v1582 = vsel %vm883, %v1566, %v1486
        %s1583 = scalar_lea.vmem %s1, 24
        %v1584 = vld [vmem:[%s1583] sm:$0xff]
        %v1585 = vld [vmem:[%s1583 + $0x8] sm:$0xff]
        %v1586 = vld [vmem:[%s1583 + $0x10] sm:$0xff]
        %v1588 = vsel %vm906, %v1567, 0
        %v1591 = vsel %vm906, %v1568, 0
        %v1594 = vsel %vm906, %v1569, 0
        %v1597 = vsel %vm906, %v1570, 0
        %v1600 = vsel %vm906, %v1571, 0
        %v1603 = vsel %vm906, %v1572, 0
        %v1606 = vsel %vm906, %v1573, 0
        %v1609 = vsel %vm906, %v1574, 0
        %v1612 = vsel %vm906, %v1575, 0
        %v1615 = vsel %vm906, %v1576, 0
        %v1618 = vsel %vm906, %v1577, 0
        %v1621 = vsel %vm906, %v1578, 0
        %v1624 = vsel %vm906, %v1579, 0
        %v1627 = vsel %vm906, %v1580, 0
        %v1630 = vsel %vm906, %v1581, 0
        %v1633 = vsel %vm906, %v1582, 0
        %1635 = vmatpush.msra.mxu0 0.0
        %1636 = vmatpush.msra.mxu0 0.0
        %1637 = vmatpush.msra.mxu0 0.0
        %1638 = vmatpush.msra.mxu0 0.0
        %1639 = vmatpush.msra.mxu0 0.0
        %1640 = vmatpush.msra.mxu0 0.0
        %1641 = vmatpush.msra.mxu0 0.0
        %1642 = vmatpush.msra.mxu0 0.0
        %1643 = vmatpush.msra.mxu0 0.0
        %1644 = vmatpush.msra.mxu0 0.0
        %1645 = vmatpush.msra.mxu0 0.0
        %1646 = vmatpush.msra.mxu0 0.0
        %1647 = vmatpush.msra.mxu0 0.0
        %1648 = vmatpush.msra.mxu0 %v1586
        %1649 = vmatpush.msra.mxu0 %v1585
        %1650 = vmatpush.msra.mxu0 %v1584
        %1651 = vmatmul.f32.gmra.mxu0 %v1588
        %v1652 = vpop.f32.mrf.mxu0
        %v1653 = vadd.f32 %v904, %v1652
        %1654 = vmatmul.f32.gmra.mxu0 %v1591
        %v1655 = vpop.f32.mrf.mxu0
        %v1656 = vadd.f32 %v904, %v1655
        %1657 = vmatmul.f32.gmra.mxu0 %v1594
        %v1658 = vpop.f32.mrf.mxu0
        %v1659 = vadd.f32 %v904, %v1658
        %1660 = vmatmul.f32.gmra.mxu0 %v1597
        %v1661 = vpop.f32.mrf.mxu0
        %v1662 = vadd.f32 %v904, %v1661
        %1663 = vmatmul.f32.gmra.mxu0 %v1600
        %v1664 = vpop.f32.mrf.mxu0
        %v1665 = vadd.f32 %v904, %v1664
        %1666 = vmatmul.f32.gmra.mxu0 %v1603
        %v1667 = vpop.f32.mrf.mxu0
        %v1668 = vadd.f32 %v904, %v1667
        %1669 = vmatmul.f32.gmra.mxu0 %v1606
        %v1670 = vpop.f32.mrf.mxu0
        %v1671 = vadd.f32 %v904, %v1670
        %1672 = vmatmul.f32.gmra.mxu0 %v1609
        %v1673 = vpop.f32.mrf.mxu0
        %v1674 = vadd.f32 %v904, %v1673
        %1675 = vmatmul.f32.gmra.mxu0 %v1612
        %v1676 = vpop.f32.mrf.mxu0
        %v1677 = vadd.f32 %v904, %v1676
        %1678 = vmatmul.f32.gmra.mxu0 %v1615
        %v1679 = vpop.f32.mrf.mxu0
        %v1680 = vadd.f32 %v904, %v1679
        %1681 = vmatmul.f32.gmra.mxu0 %v1618
        %v1682 = vpop.f32.mrf.mxu0
        %v1683 = vadd.f32 %v904, %v1682
        %1684 = vmatmul.f32.gmra.mxu0 %v1621
        %v1685 = vpop.f32.mrf.mxu0
        %v1686 = vadd.f32 %v904, %v1685
        %1687 = vmatmul.f32.gmra.mxu0 %v1624
        %v1688 = vpop.f32.mrf.mxu0
        %v1689 = vadd.f32 %v904, %v1688
        %1690 = vmatmul.f32.gmra.mxu0 %v1627
        %v1691 = vpop.f32.mrf.mxu0
        %v1692 = vadd.f32 %v904, %v1691
        %1693 = vmatmul.f32.gmra.mxu0 %v1630
        %v1694 = vpop.f32.mrf.mxu0
        %v1695 = vadd.f32 %v904, %v1694
        %1696 = vmatmul.f32.gmra.mxu0 %v1633
        %v1697 = vpop.f32.mrf.mxu0
        %v1698 = vadd.f32 %v904, %v1697
        %1699 = vdwg.mxu0
        %v1700 = vmax.f32 %v1653, 0.0
        %v1701 = vmax.f32 %v1656, 0.0
        %v1702 = vmax.f32 %v1659, 0.0
        %v1703 = vmax.f32 %v1662, 0.0
        %v1704 = vmax.f32 %v1665, 0.0
        %v1705 = vmax.f32 %v1668, 0.0
        %v1706 = vmax.f32 %v1671, 0.0
        %v1707 = vmax.f32 %v1674, 0.0
        %v1708 = vmax.f32 %v1677, 0.0
        %v1709 = vmax.f32 %v1680, 0.0
        %v1710 = vmax.f32 %v1683, 0.0
        %v1711 = vmax.f32 %v1686, 0.0
        %v1712 = vmax.f32 %v1689, 0.0
        %v1713 = vmax.f32 %v1692, 0.0
        %v1714 = vmax.f32 %v1695, 0.0
        %v1715 = vmax.f32 %v1698, 0.0
        %s1716 = scalar_lea.vmem %s358, 128 [#allocation2]
        %v1717 = vld [vmem:[%s1716] sm:$0xff]
        %v1718 = vld [vmem:[%s1716 + $0x8] sm:$0xff]
        %v1719 = vld [vmem:[%s1716 + $0x10] sm:$0xff]
        %v1720 = vld [vmem:[%s1716 + $0x18] sm:$0xff]
        %v1721 = vld [vmem:[%s1716 + $0x20] sm:$0xff]
        %v1722 = vld [vmem:[%s1716 + $0x28] sm:$0xff]
        %v1723 = vld [vmem:[%s1716 + $0x30] sm:$0xff]
        %v1724 = vld [vmem:[%s1716 + $0x38] sm:$0xff]
        %v1725 = vld [vmem:[%s1716 + $0x40] sm:$0xff]
        %v1726 = vld [vmem:[%s1716 + $0x48] sm:$0xff]
        %v1727 = vld [vmem:[%s1716 + $0x50] sm:$0xff]
        %v1728 = vld [vmem:[%s1716 + $0x58] sm:$0xff]
        %v1729 = vld [vmem:[%s1716 + $0x60] sm:$0xff]
        %v1730 = vld [vmem:[%s1716 + $0x68] sm:$0xff]
        %v1731 = vld [vmem:[%s1716 + $0x70] sm:$0xff]
        %v1732 = vld [vmem:[%s1716 + $0x78] sm:$0xff]
        %v1733 = vadd.f32 %v1700, %v1717
        %v1734 = vadd.f32 %v1701, %v1718
        %v1735 = vadd.f32 %v1702, %v1719
        %v1736 = vadd.f32 %v1703, %v1720
        %v1737 = vadd.f32 %v1704, %v1721
        %v1738 = vadd.f32 %v1705, %v1722
        %v1739 = vadd.f32 %v1706, %v1723
        %v1740 = vadd.f32 %v1707, %v1724
        %v1741 = vadd.f32 %v1708, %v1725
        %v1742 = vadd.f32 %v1709, %v1726
        %v1743 = vadd.f32 %v1710, %v1727
        %v1744 = vadd.f32 %v1711, %v1728
        %v1745 = vadd.f32 %v1712, %v1729
        %v1746 = vadd.f32 %v1713, %v1730
        %v1747 = vadd.f32 %v1714, %v1731
        %v1748 = vadd.f32 %v1715, %v1732
        %s1749 = scalar_lea.vmem %s384, 128 [#allocation3]
        %1750 = vst.msk [vmem:[%s1749] sm:$0xff] %vm815, %v1733
        %1751 = vst.msk [vmem:[%s1749 + $0x8] sm:$0xff] %vm815, %v1734
        %1752 = vst.msk [vmem:[%s1749 + $0x10] sm:$0xff] %vm815, %v1735
        %1753 = vst.msk [vmem:[%s1749 + $0x18] sm:$0xff] %vm815, %v1736
        %1754 = vst.msk [vmem:[%s1749 + $0x20] sm:$0xff] %vm815, %v1737
        %1755 = vst.msk [vmem:[%s1749 + $0x28] sm:$0xff] %vm815, %v1738
        %1756 = vst.msk [vmem:[%s1749 + $0x30] sm:$0xff] %vm815, %v1739
        %1757 = vst.msk [vmem:[%s1749 + $0x38] sm:$0xff] %vm815, %v1740
        %1758 = vst.msk [vmem:[%s1749 + $0x40] sm:$0xff] %vm815, %v1741
        %1759 = vst.msk [vmem:[%s1749 + $0x48] sm:$0xff] %vm815, %v1742
        %1760 = vst.msk [vmem:[%s1749 + $0x50] sm:$0xff] %vm815, %v1743
        %1761 = vst.msk [vmem:[%s1749 + $0x58] sm:$0xff] %vm815, %v1744
        %1762 = vst.msk [vmem:[%s1749 + $0x60] sm:$0xff] %vm815, %v1745
        %1763 = vst.msk [vmem:[%s1749 + $0x68] sm:$0xff] %vm815, %v1746
        %1764 = vst.msk [vmem:[%s1749 + $0x70] sm:$0xff] %vm815, %v1747
        %1765 = vst.msk [vmem:[%s1749 + $0x78] sm:$0xff] %vm815, %v1748
        %s1766 = sand.u32 %s133, 1
        %s1767 = sand.u32 %s133, 1
        %s1768 = smul.addr %s1767, 256
        %s1769 = scalar_lea.vmem [#allocation3], %s1768
        // Predicated region
        $region75: #{tpu_custom_call.1} parent=69 // pred_check
          %p1770 = pneg %p143
        $region76: #{tpu_custom_call.1} parent=69 // pred_check_branch
          %1772 = sbr.rel (%p1770) target = $region78
        $region77: #{tpu_custom_call.1} parent=69 // pred_region
          %s1773 = smul.u32 16, %s20
          %s1774 = smul.addr %s19, 64
          %s1775 = sadd.s32 %s1773, %s1774
          %s1776 = smul.addr %s1775, 8
          %s1777 = scalar_lea.vmem %s4, %s1776
          // Predicated region
          $region79: #{tpu_custom_call.1} parent=77 // pred_check
            _
          $region80: #{tpu_custom_call.1} parent=77 // pred_check_branch
            %1779 = sbr.rel (0) target = $region82
          $region81: #{tpu_custom_call.1} parent=77 // pred_region
            // Predicated region
            $region83: #{tpu_custom_call.1} parent=81 // pred_check
              _
            $region84: #{tpu_custom_call.1} parent=81 // pred_check_branch
              %1781 = sbr.rel (0) target = $region86
            $region85: #{tpu_custom_call.1} parent=81 // pred_region
              // Predicated region
              $region98: #{tpu_custom_call.1} parent=85 // pred_check
                _
              $region99: #{tpu_custom_call.1} parent=85 // pred_check_branch
                %1859 = sbr.rel (0) target = $region101
              $region100: #{tpu_custom_call.1} parent=85 // pred_region
                loop: start=0, step=1, limit=1
                $region102: #{tpu_custom_call.1} parent=100 // loop_pre_header
                  _
                $region103: #{tpu_custom_call.1} parent=100 // loop_header
                  %s1861 = sphi 0, %s1865
                  %p1862 = scmp.ge.s32.totalorder %s1861, 1
                  %s1866 = sphi %s1769, %s1769
                  %s1867 = sphi %s1777, %s1777
                $region104: #{tpu_custom_call.1} parent=100 // loop_header_branch
                  %1864 = sbr.rel (%p1862) target = $region108
                $region105: #{tpu_custom_call.1} parent=100 // loop_body
                  %v1868 = vld [vmem:[%s1866] sm:$0xff]
                  %1869 = vst [vmem:[%s1867] sm:$0xff] %v1868
                  %v1870 = vld [vmem:[%s1866 + $0x8] sm:$0xff]
                  %1871 = vst [vmem:[%s1867 + $0x8] sm:$0xff] %v1870
                  %v1872 = vld [vmem:[%s1866 + $0x10] sm:$0xff]
                  %1873 = vst [vmem:[%s1867 + $0x10] sm:$0xff] %v1872
                  %v1874 = vld [vmem:[%s1866 + $0x18] sm:$0xff]
                  %1875 = vst [vmem:[%s1867 + $0x18] sm:$0xff] %v1874
                  %v1876 = vld [vmem:[%s1866 + $0x20] sm:$0xff]
                  %1877 = vst [vmem:[%s1867 + $0x20] sm:$0xff] %v1876
                  %v1878 = vld [vmem:[%s1866 + $0x28] sm:$0xff]
                  %1879 = vst [vmem:[%s1867 + $0x28] sm:$0xff] %v1878
                  %v1880 = vld [vmem:[%s1866 + $0x30] sm:$0xff]
                  %1881 = vst [vmem:[%s1867 + $0x30] sm:$0xff] %v1880
                  %v1882 = vld [vmem:[%s1866 + $0x38] sm:$0xff]
                  %1883 = vst [vmem:[%s1867 + $0x38] sm:$0xff] %v1882
                  %v1884 = vld [vmem:[%s1866 + $0x40] sm:$0xff]
                  %1885 = vst [vmem:[%s1867 + $0x40] sm:$0xff] %v1884
                  %v1886 = vld [vmem:[%s1866 + $0x48] sm:$0xff]
                  %1887 = vst [vmem:[%s1867 + $0x48] sm:$0xff] %v1886
                  %v1888 = vld [vmem:[%s1866 + $0x50] sm:$0xff]
                  %1889 = vst [vmem:[%s1867 + $0x50] sm:$0xff] %v1888
                  %v1890 = vld [vmem:[%s1866 + $0x58] sm:$0xff]
                  %1891 = vst [vmem:[%s1867 + $0x58] sm:$0xff] %v1890
                  %v1892 = vld [vmem:[%s1866 + $0x60] sm:$0xff]
                  %1893 = vst [vmem:[%s1867 + $0x60] sm:$0xff] %v1892
                  %v1894 = vld [vmem:[%s1866 + $0x68] sm:$0xff]
                  %1895 = vst [vmem:[%s1867 + $0x68] sm:$0xff] %v1894
                  %v1896 = vld [vmem:[%s1866 + $0x70] sm:$0xff]
                  %1897 = vst [vmem:[%s1867 + $0x70] sm:$0xff] %v1896
                  %v1898 = vld [vmem:[%s1866 + $0x78] sm:$0xff]
                  %1899 = vst [vmem:[%s1867 + $0x78] sm:$0xff] %v1898
                  %v1900 = vld [vmem:[%s1866 + $0x80] sm:$0xff]
                  %1901 = vst [vmem:[%s1867 + $0x100] sm:$0xff] %v1900
                  %v1902 = vld [vmem:[%s1866 + $0x88] sm:$0xff]
                  %1903 = vst [vmem:[%s1867 + $0x108] sm:$0xff] %v1902
                  %v1904 = vld [vmem:[%s1866 + $0x90] sm:$0xff]
                  %1905 = vst [vmem:[%s1867 + $0x110] sm:$0xff] %v1904
                  %v1906 = vld [vmem:[%s1866 + $0x98] sm:$0xff]
                  %1907 = vst [vmem:[%s1867 + $0x118] sm:$0xff] %v1906
                  %v1908 = vld [vmem:[%s1866 + $0xa0] sm:$0xff]
                  %1909 = vst [vmem:[%s1867 + $0x120] sm:$0xff] %v1908
                  %v1910 = vld [vmem:[%s1866 + $0xa8] sm:$0xff]
                  %1911 = vst [vmem:[%s1867 + $0x128] sm:$0xff] %v1910
                  %v1912 = vld [vmem:[%s1866 + $0xb0] sm:$0xff]
                  %1913 = vst [vmem:[%s1867 + $0x130] sm:$0xff] %v1912
                  %v1914 = vld [vmem:[%s1866 + $0xb8] sm:$0xff]
                  %1915 = vst [vmem:[%s1867 + $0x138] sm:$0xff] %v1914
                  %v1916 = vld [vmem:[%s1866 + $0xc0] sm:$0xff]
                  %1917 = vst [vmem:[%s1867 + $0x140] sm:$0xff] %v1916
                  %v1918 = vld [vmem:[%s1866 + $0xc8] sm:$0xff]
                  %1919 = vst [vmem:[%s1867 + $0x148] sm:$0xff] %v1918
                  %v1920 = vld [vmem:[%s1866 + $0xd0] sm:$0xff]
                  %1921 = vst [vmem:[%s1867 + $0x150] sm:$0xff] %v1920
                  %v1922 = vld [vmem:[%s1866 + $0xd8] sm:$0xff]
                  %1923 = vst [vmem:[%s1867 + $0x158] sm:$0xff] %v1922
                  %v1924 = vld [vmem:[%s1866 + $0xe0] sm:$0xff]
                  %1925 = vst [vmem:[%s1867 + $0x160] sm:$0xff] %v1924
                  %v1926 = vld [vmem:[%s1866 + $0xe8] sm:$0xff]
                  %1927 = vst [vmem:[%s1867 + $0x168] sm:$0xff] %v1926
                  %v1928 = vld [vmem:[%s1866 + $0xf0] sm:$0xff]
                  %1929 = vst [vmem:[%s1867 + $0x170] sm:$0xff] %v1928
                  %v1930 = vld [vmem:[%s1866 + $0xf8] sm:$0xff]
                  %1931 = vst [vmem:[%s1867 + $0x178] sm:$0xff] %v1930
                $region106: #{tpu_custom_call.1} parent=100 // loop_footer
                  %s1865 = sadd.s32 1, %s1861
                $region107: #{tpu_custom_call.1} parent=100 // loop_footer_branch
                  %1860 = sbr.rel target = $region103
                $region108: #{tpu_custom_call.1} parent=100 // loop_exit
                  _
              $region101: #{tpu_custom_call.1} parent=85 // pred_fallthru
                _
              // Predicated region
              $region109: #{tpu_custom_call.1} parent=85 // pred_check
                _
              $region110: #{tpu_custom_call.1} parent=85 // pred_check_branch
                %1933 = sbr.rel target = $region112
              $region111: #{tpu_custom_call.1} parent=85 // pred_region
                _
              $region112: #{tpu_custom_call.1} parent=85 // pred_fallthru
                _
            $region86: #{tpu_custom_call.1} parent=81 // pred_fallthru
              _
            // Predicated region
            $region87: #{tpu_custom_call.1} parent=81 // pred_check
              _
            $region88: #{tpu_custom_call.1} parent=81 // pred_check_branch
              %1783 = sbr.rel target = $region90
            $region89: #{tpu_custom_call.1} parent=81 // pred_region
              %s1785 = ssub.s32 256, 1
              loop: start=0, step=1, limit=1
              $region91: #{tpu_custom_call.1} parent=89 // loop_pre_header
                _
              $region92: #{tpu_custom_call.1} parent=89 // loop_header
                %s1787 = sphi 0, %s1791
                %p1788 = scmp.ge.s32.totalorder %s1787, 1
                %s1792 = sphi %s1769, %s1769
                %s1793 = sphi %s1777, %s1777
              $region93: #{tpu_custom_call.1} parent=89 // loop_header_branch
                %1790 = sbr.rel (%p1788) target = $region97
              $region94: #{tpu_custom_call.1} parent=89 // loop_body
                %v1794 = vld [vmem:[%s1792] sm:%s1785]
                %1795 = vst [vmem:[%s1793] sm:%s1785] %v1794
                %v1796 = vld [vmem:[%s1792 + $0x8] sm:%s1785]
                %1797 = vst [vmem:[%s1793 + $0x8] sm:%s1785] %v1796
                %v1798 = vld [vmem:[%s1792 + $0x10] sm:%s1785]
                %1799 = vst [vmem:[%s1793 + $0x10] sm:%s1785] %v1798
                %v1800 = vld [vmem:[%s1792 + $0x18] sm:%s1785]
                %1801 = vst [vmem:[%s1793 + $0x18] sm:%s1785] %v1800
                %v1802 = vld [vmem:[%s1792 + $0x20] sm:%s1785]
                %1803 = vst [vmem:[%s1793 + $0x20] sm:%s1785] %v1802
                %v1804 = vld [vmem:[%s1792 + $0x28] sm:%s1785]
                %1805 = vst [vmem:[%s1793 + $0x28] sm:%s1785] %v1804
                %v1806 = vld [vmem:[%s1792 + $0x30] sm:%s1785]
                %1807 = vst [vmem:[%s1793 + $0x30] sm:%s1785] %v1806
                %v1808 = vld [vmem:[%s1792 + $0x38] sm:%s1785]
                %1809 = vst [vmem:[%s1793 + $0x38] sm:%s1785] %v1808
                %v1810 = vld [vmem:[%s1792 + $0x40] sm:%s1785]
                %1811 = vst [vmem:[%s1793 + $0x40] sm:%s1785] %v1810
                %v1812 = vld [vmem:[%s1792 + $0x48] sm:%s1785]
                %1813 = vst [vmem:[%s1793 + $0x48] sm:%s1785] %v1812
                %v1814 = vld [vmem:[%s1792 + $0x50] sm:%s1785]
                %1815 = vst [vmem:[%s1793 + $0x50] sm:%s1785] %v1814
                %v1816 = vld [vmem:[%s1792 + $0x58] sm:%s1785]
                %1817 = vst [vmem:[%s1793 + $0x58] sm:%s1785] %v1816
                %v1818 = vld [vmem:[%s1792 + $0x60] sm:%s1785]
                %1819 = vst [vmem:[%s1793 + $0x60] sm:%s1785] %v1818
                %v1820 = vld [vmem:[%s1792 + $0x68] sm:%s1785]
                %1821 = vst [vmem:[%s1793 + $0x68] sm:%s1785] %v1820
                %v1822 = vld [vmem:[%s1792 + $0x70] sm:%s1785]
                %1823 = vst [vmem:[%s1793 + $0x70] sm:%s1785] %v1822
                %v1824 = vld [vmem:[%s1792 + $0x78] sm:%s1785]
                %1825 = vst [vmem:[%s1793 + $0x78] sm:%s1785] %v1824
                %v1826 = vld [vmem:[%s1792 + $0x80] sm:%s1785]
                %1827 = vst [vmem:[%s1793 + $0x100] sm:%s1785] %v1826
                %v1828 = vld [vmem:[%s1792 + $0x88] sm:%s1785]
                %1829 = vst [vmem:[%s1793 + $0x108] sm:%s1785] %v1828
                %v1830 = vld [vmem:[%s1792 + $0x90] sm:%s1785]
                %1831 = vst [vmem:[%s1793 + $0x110] sm:%s1785] %v1830
                %v1832 = vld [vmem:[%s1792 + $0x98] sm:%s1785]
                %1833 = vst [vmem:[%s1793 + $0x118] sm:%s1785] %v1832
                %v1834 = vld [vmem:[%s1792 + $0xa0] sm:%s1785]
                %1835 = vst [vmem:[%s1793 + $0x120] sm:%s1785] %v1834
                %v1836 = vld [vmem:[%s1792 + $0xa8] sm:%s1785]
                %1837 = vst [vmem:[%s1793 + $0x128] sm:%s1785] %v1836
                %v1838 = vld [vmem:[%s1792 + $0xb0] sm:%s1785]
                %1839 = vst [vmem:[%s1793 + $0x130] sm:%s1785] %v1838
                %v1840 = vld [vmem:[%s1792 + $0xb8] sm:%s1785]
                %1841 = vst [vmem:[%s1793 + $0x138] sm:%s1785] %v1840
                %v1842 = vld [vmem:[%s1792 + $0xc0] sm:%s1785]
                %1843 = vst [vmem:[%s1793 + $0x140] sm:%s1785] %v1842
                %v1844 = vld [vmem:[%s1792 + $0xc8] sm:%s1785]
                %1845 = vst [vmem:[%s1793 + $0x148] sm:%s1785] %v1844
                %v1846 = vld [vmem:[%s1792 + $0xd0] sm:%s1785]
                %1847 = vst [vmem:[%s1793 + $0x150] sm:%s1785] %v1846
                %v1848 = vld [vmem:[%s1792 + $0xd8] sm:%s1785]
                %1849 = vst [vmem:[%s1793 + $0x158] sm:%s1785] %v1848
                %v1850 = vld [vmem:[%s1792 + $0xe0] sm:%s1785]
                %1851 = vst [vmem:[%s1793 + $0x160] sm:%s1785] %v1850
                %v1852 = vld [vmem:[%s1792 + $0xe8] sm:%s1785]
                %1853 = vst [vmem:[%s1793 + $0x168] sm:%s1785] %v1852
                %v1854 = vld [vmem:[%s1792 + $0xf0] sm:%s1785]
                %1855 = vst [vmem:[%s1793 + $0x170] sm:%s1785] %v1854
                %v1856 = vld [vmem:[%s1792 + $0xf8] sm:%s1785]
                %1857 = vst [vmem:[%s1793 + $0x178] sm:%s1785] %v1856
              $region95: #{tpu_custom_call.1} parent=89 // loop_footer
                %s1791 = sadd.s32 1, %s1787
              $region96: #{tpu_custom_call.1} parent=89 // loop_footer_branch
                %1786 = sbr.rel target = $region92
              $region97: #{tpu_custom_call.1} parent=89 // loop_exit
                _
            $region90: #{tpu_custom_call.1} parent=81 // pred_fallthru
              _
          $region82: #{tpu_custom_call.1} parent=77 // pred_fallthru
            _
          %1934 = vnop
        $region78: #{tpu_custom_call.1} parent=69 // pred_fallthru
          _
      $region70: #{tpu_custom_call.1} parent=5 // pred_fallthru
        _
      %p1935 = scmp.le.s32.totalorder 2, %s10
      // Predicated region
      $region113: #{tpu_custom_call.1} parent=5 // pred_check
        %p1936 = pneg %p1935
      $region114: #{tpu_custom_call.1} parent=5 // pred_check_branch
        %1938 = sbr.rel (%p1936) target = $region116
      $region115: #{tpu_custom_call.1} parent=5 // pred_region
        %s1939 = ssub.s32 %s10, 2
        // Predicated region
        $region117: #{tpu_custom_call.1} parent=115 // pred_check
          %p1940 = pneg %p149
        $region118: #{tpu_custom_call.1} parent=115 // pred_check_branch
          %1942 = sbr.rel (%p1940) target = $region120
        $region119: #{tpu_custom_call.1} parent=115 // pred_region
          %s1943 = sand.u32 %s134, 1
          %s1944 = sand.u32 %s134, 1
          %s1945 = smul.addr %s1944, 256
          %s1946 = scalar_lea.vmem [#allocation3], %s1945
        $region120: #{tpu_custom_call.1} parent=115 // pred_fallthru
          _
      $region116: #{tpu_custom_call.1} parent=5 // pred_fallthru
        _
    $region6: #{tpu_custom_call.1} parent=1 // loop_footer
      %s14 = sadd.s32 1, %s10
    $region7: #{tpu_custom_call.1} parent=1 // loop_footer_branch
      %9 = sbr.rel target = $region3
    $region8: #{tpu_custom_call.1} parent=1 // loop_exit
      _

</llo_original>
